<compile_context>
chip_gen: v7x
topology: tpu7x:2x2x1
jax: 0.10.0
libtpu: 0.0.40
codegen_flags: <defaults>
</compile_context>

<pallas_src>
import functools

import jax
import jax.numpy as jnp
from jax.experimental import pallas as pl
from jax.experimental.pallas import tpu as pltpu


def _exclusion_level_kernel(img1_ref, img2_ref, sx_ref, sy_ref):
    """Per-batch-element channel-pair sums for one pyramid level.

    img*_ref : (1, C, H, W) block of the input images (native dtype).
    sx_ref   : (1, C, C) f32; sx[0, j, i] = sum_{h,w} gx1_s[j]^2 * gx2_s[i]^2
    sy_ref   : (1, C, C) f32; same for the y (width) gradients.
    """
    i1 = img1_ref[0].astype(jnp.float32)   # (C, H, W)
    i2 = img2_ref[0].astype(jnp.float32)

    # Spatial forward differences (+1e-6, exactly as in the PyTorch module).
    gx1 = i1[:, 1:, :] - i1[:, :-1, :] + 1e-6    # (C, H-1, W)
    gy1 = i1[:, :, 1:] - i1[:, :, :-1] + 1e-6    # (C, H, W-1)
    gx2 = i2[:, 1:, :] - i2[:, :-1, :] + 1e-6
    gy2 = i2[:, :, 1:] - i2[:, :, :-1] + 1e-6

    def squash_sq(g):
        # (sigmoid(g) * 2 - 1)^2 == tanh(g / 2)^2 ; tanh runs on the EUP slot.
        t = jnp.tanh(g * 0.5)
        return t * t

    gx1q, gx2q = squash_sq(gx1), squash_sq(gx2)
    gy1q, gy2q = squash_sq(gy1), squash_sq(gy2)

    def pair_sums(aq, bq):
        # aq, bq: (C, Hp, Wp) -> (C, C): out[j, i] = sum_{h,w} aq[j] * bq[i].
        # Pure VPU broadcast-multiply + two minor-axis reduces (C is tiny).
        prod = aq[:, None, :, :] * bq[None, :, :, :]   # (C, C, Hp, Wp)
        return prod.sum(axis=-1).sum(axis=-1)          # (C, C)

    sx_ref[0] = pair_sums(gx1q, gx2q)
    sy_ref[0] = pair_sums(gy1q, gy2q)


def _level_pair_sums(img1, img2):
    """Per-batch (B, C, C) x/y channel-pair spatial sums for one level."""
    B, C, H, W = img1.shape
    img_spec = pl.BlockSpec((1, C, H, W), lambda b: (b, 0, 0, 0))
    out_spec = pl.BlockSpec((1, C, C), lambda b: (b, 0, 0))
    return pl.pallas_call(
        _exclusion_level_kernel,
        out_shape=(jax.ShapeDtypeStruct((B, C, C), jnp.float32),
                   jax.ShapeDtypeStruct((B, C, C), jnp.float32)),
        grid_spec=pltpu.PrefetchScalarGridSpec(
            num_scalar_prefetch=0,
            grid=(B,),
            in_specs=[img_spec, img_spec],
            out_specs=[out_spec, out_spec],
        ),
        compiler_params=pltpu.CompilerParams(
            dimension_semantics=("parallel",)),
    )(img1, img2)


def _avg_pool2(x):
    """torch.nn.AvgPool2d(2, stride=2) on NCHW (drops odd trailing row/col)."""
    B, C, H, W = x.shape
    H2, W2 = H // 2, W // 2
    x = x[:, :, : H2 * 2, : W2 * 2].reshape(B, C, H2, 2, W2, 2)
    return x.mean(axis=(3, 5))


@functools.partial(jax.jit, static_argnames="level")
def exclusion_loss(img1, img2, level=3):
    """Pallas implementation of ExclusionLoss.forward. Returns a scalar."""
    assert img1.shape == img2.shape
    gradx_sum = jnp.float32(0.0)
    grady_sum = jnp.float32(0.0)
    for l in range(level):
        B, C, H, W = img1.shape
        sx, sy = _level_pair_sums(img1, img2)            # (B, C, C) each
        mean_x = sx.sum(axis=0) / float(B * (H - 1) * W)
        mean_y = sy.sum(axis=0) / float(B * H * (W - 1))
        gradx_sum = gradx_sum + jnp.sum(mean_x ** 0.25)
        grady_sum = grady_sum + jnp.sum(mean_y ** 0.25)
        if l + 1 < level:
            # TODO(synk): the 2x2 average pooling between levels stays in plain
            # JAX; it could be fused into the level kernel as extra outputs.
            img1 = _avg_pool2(img1)
            img2 = _avg_pool2(img2)
    # The PyTorch module divides by (level * 9), i.e. assumes 3 channels.
    loss = gradx_sum / (level * 9) + grady_sum / (level * 9)
    return loss / 2.0


def _exclusion_loss_ref(img1, img2, level=3):
    """Pure-JAX reference mirroring the PyTorch module literally."""
    def compute_gradient(img):
        gradx = img[:, :, 1:, :] - img[:, :, :-1, :] + 1e-6
        grady = img[:, :, :, 1:] - img[:, :, :, :-1] + 1e-6
        return gradx, grady

    gradx_loss, grady_loss = [], []
    for l in range(level):
        gx1, gy1 = compute_gradient(img1)
        gx2, gy2 = compute_gradient(img2)
        gx1s = jax.nn.sigmoid(gx1) * 2 - 1
        gy1s = jax.nn.sigmoid(gy1) * 2 - 1
        gx2s = jax.nn.sigmoid(gx2) * 2 - 1
        gy2s = jax.nn.sigmoid(gy2) * 2 - 1
        C = img1.shape[1]
        for i in range(C):
            for j in range(C):
                gradx_loss.append(
                    jnp.mean(gx1s[:, j] ** 2 * gx2s[:, i] ** 2) ** 0.25)
                grady_loss.append(
                    jnp.mean(gy1s[:, j] ** 2 * gy2s[:, i] ** 2) ** 0.25)
        if l + 1 < level:
            img1 = _avg_pool2(img1)
            img2 = _avg_pool2(img2)
    loss = sum(gradx_loss) / (level * 9) + sum(grady_loss) / (level * 9)
    return loss / 2.0


if __name__ == "__main__":
    key = jax.random.PRNGKey(0)
    k1, k2 = jax.random.split(key)

    # NCHW images; 3 channels to match the module's hard-coded /9 normalizer.
    shape = (2, 3, 16, 16)
    img1 = jax.random.uniform(k1, shape, dtype=jnp.float32)
    img2 = jax.random.uniform(k2, shape, dtype=jnp.float32)

    loss = exclusion_loss(img1, img2, level=3)
    loss = jax.block_until_ready(loss)

    ref = _exclusion_loss_ref(img1, img2, level=3)
    assert jnp.allclose(loss, ref, rtol=1e-5, atol=1e-6), (loss, ref)

    print("KERNEL_OK")
</pallas_src>

<mosaic_0001>
module attributes {stable_mosaic.version = 11 : i64} {
  func.func @_exclusion_level_kernel(%arg0: i32, %arg1: memref<1x3x8x8xf32, #tpu.memory_space<vmem>>, %arg2: memref<1x3x8x8xf32, #tpu.memory_space<vmem>>, %arg3: memref<1x3x3xf32, #tpu.memory_space<vmem>>, %arg4: memref<1x3x3xf32, #tpu.memory_space<vmem>>) attributes {dimension_semantics = [#tpu.dimension_semantics<parallel>], iteration_bounds = array<i64: 2>, scalar_prefetch = 0 : i64, scratch_operands = 0 : i64, tpu.core_type = #tpu.core_type<tc>, window_params = [{transform_indices = @transform_0, window_bounds = array<i64: 1, 3, 8, 8>}, {transform_indices = @transform_1, window_bounds = array<i64: 1, 3, 8, 8>}, {transform_indices = @transform_2, window_bounds = array<i64: 1, 3, 3>}, {transform_indices = @transform_3, window_bounds = array<i64: 1, 3, 3>}]} {
    %c0 = arith.constant 0 : index
    %c0_0 = arith.constant 0 : index
    %c0_1 = arith.constant 0 : index
    %c0_2 = arith.constant 0 : index
    %0 = vector.load %arg1[%c0, %c0_0, %c0_1, %c0_2] : memref<1x3x8x8xf32, #tpu.memory_space<vmem>>, vector<1x3x8x8xf32>
    %1 = vector.shape_cast %0 : vector<1x3x8x8xf32> to vector<3x8x8xf32>
    %c0_3 = arith.constant 0 : index
    %c0_4 = arith.constant 0 : index
    %c0_5 = arith.constant 0 : index
    %c0_6 = arith.constant 0 : index
    %2 = vector.load %arg2[%c0_3, %c0_4, %c0_5, %c0_6] : memref<1x3x8x8xf32, #tpu.memory_space<vmem>>, vector<1x3x8x8xf32>
    %3 = vector.shape_cast %2 : vector<1x3x8x8xf32> to vector<3x8x8xf32>
    %4 = vector.extract_strided_slice %1 {offsets = [0, 1, 0], sizes = [3, 7, 8], strides = [1, 1, 1]} : vector<3x8x8xf32> to vector<3x7x8xf32>
    %5 = vector.extract_strided_slice %1 {offsets = [0, 0, 0], sizes = [3, 7, 8], strides = [1, 1, 1]} : vector<3x8x8xf32> to vector<3x7x8xf32>
    %6 = arith.subf %4, %5 : vector<3x7x8xf32>
    %cst = arith.constant 9.99999997E-7 : f32
    %7 = vector.broadcast %cst : f32 to vector<3x7x8xf32>
    %8 = arith.addf %6, %7 : vector<3x7x8xf32>
    %9 = vector.extract_strided_slice %1 {offsets = [0, 0, 1], sizes = [3, 8, 7], strides = [1, 1, 1]} : vector<3x8x8xf32> to vector<3x8x7xf32>
    %10 = vector.extract_strided_slice %1 {offsets = [0, 0, 0], sizes = [3, 8, 7], strides = [1, 1, 1]} : vector<3x8x8xf32> to vector<3x8x7xf32>
    %11 = arith.subf %9, %10 : vector<3x8x7xf32>
    %cst_7 = arith.constant 9.99999997E-7 : f32
    %12 = vector.broadcast %cst_7 : f32 to vector<3x8x7xf32>
    %13 = arith.addf %11, %12 : vector<3x8x7xf32>
    %14 = vector.extract_strided_slice %3 {offsets = [0, 1, 0], sizes = [3, 7, 8], strides = [1, 1, 1]} : vector<3x8x8xf32> to vector<3x7x8xf32>
    %15 = vector.extract_strided_slice %3 {offsets = [0, 0, 0], sizes = [3, 7, 8], strides = [1, 1, 1]} : vector<3x8x8xf32> to vector<3x7x8xf32>
    %16 = arith.subf %14, %15 : vector<3x7x8xf32>
    %cst_8 = arith.constant 9.99999997E-7 : f32
    %17 = vector.broadcast %cst_8 : f32 to vector<3x7x8xf32>
    %18 = arith.addf %16, %17 : vector<3x7x8xf32>
    %19 = vector.extract_strided_slice %3 {offsets = [0, 0, 1], sizes = [3, 8, 7], strides = [1, 1, 1]} : vector<3x8x8xf32> to vector<3x8x7xf32>
    %20 = vector.extract_strided_slice %3 {offsets = [0, 0, 0], sizes = [3, 8, 7], strides = [1, 1, 1]} : vector<3x8x8xf32> to vector<3x8x7xf32>
    %21 = arith.subf %19, %20 : vector<3x8x7xf32>
    %cst_9 = arith.constant 9.99999997E-7 : f32
    %22 = vector.broadcast %cst_9 : f32 to vector<3x8x7xf32>
    %23 = arith.addf %21, %22 : vector<3x8x7xf32>
    %cst_10 = arith.constant 5.000000e-01 : f32
    %24 = vector.broadcast %cst_10 : f32 to vector<3x7x8xf32>
    %25 = arith.mulf %8, %24 : vector<3x7x8xf32>
    %26 = math.tanh %25 : vector<3x7x8xf32>
    %27 = arith.mulf %26, %26 : vector<3x7x8xf32>
    %cst_11 = arith.constant 5.000000e-01 : f32
    %28 = vector.broadcast %cst_11 : f32 to vector<3x7x8xf32>
    %29 = arith.mulf %18, %28 : vector<3x7x8xf32>
    %30 = math.tanh %29 : vector<3x7x8xf32>
    %31 = arith.mulf %30, %30 : vector<3x7x8xf32>
    %cst_12 = arith.constant 5.000000e-01 : f32
    %32 = vector.broadcast %cst_12 : f32 to vector<3x8x7xf32>
    %33 = arith.mulf %13, %32 : vector<3x8x7xf32>
    %34 = math.tanh %33 : vector<3x8x7xf32>
    %35 = arith.mulf %34, %34 : vector<3x8x7xf32>
    %cst_13 = arith.constant 5.000000e-01 : f32
    %36 = vector.broadcast %cst_13 : f32 to vector<3x8x7xf32>
    %37 = arith.mulf %23, %36 : vector<3x8x7xf32>
    %38 = math.tanh %37 : vector<3x8x7xf32>
    %39 = arith.mulf %38, %38 : vector<3x8x7xf32>
    %40 = vector.shape_cast %27 : vector<3x7x8xf32> to vector<3x1x7x8xf32>
    %41 = vector.shape_cast %31 : vector<3x7x8xf32> to vector<1x3x7x8xf32>
    %42 = vector.broadcast %40 : vector<3x1x7x8xf32> to vector<3x3x7x8xf32>
    %43 = vector.broadcast %41 : vector<1x3x7x8xf32> to vector<3x3x7x8xf32>
    %44 = arith.mulf %42, %43 : vector<3x3x7x8xf32>
    %cst_14 = arith.constant dense<0.000000e+00> : vector<3x3x7xf32>
    %45 = vector.multi_reduction <add>, %44, %cst_14 [3] : vector<3x3x7x8xf32> to vector<3x3x7xf32>
    %cst_15 = arith.constant dense<0.000000e+00> : vector<3x3xf32>
    %46 = vector.multi_reduction <add>, %45, %cst_15 [2] : vector<3x3x7xf32> to vector<3x3xf32>
    %c0_16 = arith.constant 0 : index
    %c0_17 = arith.constant 0 : index
    %c0_18 = arith.constant 0 : index
    %47 = vector.load %arg3[%c0_16, %c0_17, %c0_18] : memref<1x3x3xf32, #tpu.memory_space<vmem>>, vector<1x3x3xf32>
    %48 = vector.shape_cast %47 : vector<1x3x3xf32> to vector<3x3xf32>
    %49 = vector.shape_cast %46 : vector<3x3xf32> to vector<1x3x3xf32>
    tpu.vector_store %arg3[%c0_16, %c0_17, %c0_18], %49 {strides = array<i32>} : memref<1x3x3xf32, #tpu.memory_space<vmem>>, vector<1x3x3xf32>,
    %50 = vector.shape_cast %35 : vector<3x8x7xf32> to vector<3x1x8x7xf32>
    %51 = vector.shape_cast %39 : vector<3x8x7xf32> to vector<1x3x8x7xf32>
    %52 = vector.broadcast %50 : vector<3x1x8x7xf32> to vector<3x3x8x7xf32>
    %53 = vector.broadcast %51 : vector<1x3x8x7xf32> to vector<3x3x8x7xf32>
    %54 = arith.mulf %52, %53 : vector<3x3x8x7xf32>
    %cst_19 = arith.constant dense<0.000000e+00> : vector<3x3x8xf32>
    %55 = vector.multi_reduction <add>, %54, %cst_19 [3] : vector<3x3x8x7xf32> to vector<3x3x8xf32>
    %cst_20 = arith.constant dense<0.000000e+00> : vector<3x3xf32>
    %56 = vector.multi_reduction <add>, %55, %cst_20 [2] : vector<3x3x8xf32> to vector<3x3xf32>
    %c0_21 = arith.constant 0 : index
    %c0_22 = arith.constant 0 : index
    %c0_23 = arith.constant 0 : index
    %57 = vector.load %arg4[%c0_21, %c0_22, %c0_23] : memref<1x3x3xf32, #tpu.memory_space<vmem>>, vector<1x3x3xf32>
    %58 = vector.shape_cast %57 : vector<1x3x3xf32> to vector<3x3xf32>
    %59 = vector.shape_cast %56 : vector<3x3xf32> to vector<1x3x3xf32>
    tpu.vector_store %arg4[%c0_21, %c0_22, %c0_23], %59 {strides = array<i32>} : memref<1x3x3xf32, #tpu.memory_space<vmem>>, vector<1x3x3xf32>,
    return
  }
  func.func @transform_0(%arg0: i32) -> (i32, i32, i32, i32) {
    %c0_i32 = arith.constant 0 : i32
    %c0_i32_0 = arith.constant 0 : i32
    %c0_i32_1 = arith.constant 0 : i32
    %c0_i32_2 = arith.constant 0 : i32
    return %arg0, %c0_i32, %c0_i32_0, %c0_i32_1 : i32, i32, i32, i32
  }
  func.func @transform_1(%arg0: i32) -> (i32, i32, i32, i32) {
    %c0_i32 = arith.constant 0 : i32
    %c0_i32_0 = arith.constant 0 : i32
    %c0_i32_1 = arith.constant 0 : i32
    %c0_i32_2 = arith.constant 0 : i32
    return %arg0, %c0_i32, %c0_i32_0, %c0_i32_1 : i32, i32, i32, i32
  }
  func.func @transform_2(%arg0: i32) -> (i32, i32, i32) {
    %c0_i32 = arith.constant 0 : i32
    %c0_i32_0 = arith.constant 0 : i32
    %c0_i32_1 = arith.constant 0 : i32
    return %arg0, %c0_i32, %c0_i32_0 : i32, i32, i32
  }
  func.func @transform_3(%arg0: i32) -> (i32, i32, i32) {
    %c0_i32 = arith.constant 0 : i32
    %c0_i32_0 = arith.constant 0 : i32
    %c0_i32_1 = arith.constant 0 : i32
    return %arg0, %c0_i32, %c0_i32_0 : i32, i32, i32
  }
}

module attributes {stable_mosaic.version = 11 : i64} {
  func.func @_exclusion_level_kernel(%arg0: i32, %arg1: memref<1x3x16x16xf32, #tpu.memory_space<vmem>>, %arg2: memref<1x3x16x16xf32, #tpu.memory_space<vmem>>, %arg3: memref<1x3x3xf32, #tpu.memory_space<vmem>>, %arg4: memref<1x3x3xf32, #tpu.memory_space<vmem>>) attributes {dimension_semantics = [#tpu.dimension_semantics<parallel>], iteration_bounds = array<i64: 2>, scalar_prefetch = 0 : i64, scratch_operands = 0 : i64, tpu.core_type = #tpu.core_type<tc>, window_params = [{transform_indices = @transform_0, window_bounds = array<i64: 1, 3, 16, 16>}, {transform_indices = @transform_1, window_bounds = array<i64: 1, 3, 16, 16>}, {transform_indices = @transform_2, window_bounds = array<i64: 1, 3, 3>}, {transform_indices = @transform_3, window_bounds = array<i64: 1, 3, 3>}]} {
    %c0 = arith.constant 0 : index
    %c0_0 = arith.constant 0 : index
    %c0_1 = arith.constant 0 : index
    %c0_2 = arith.constant 0 : index
    %0 = vector.load %arg1[%c0, %c0_0, %c0_1, %c0_2] : memref<1x3x16x16xf32, #tpu.memory_space<vmem>>, vector<1x3x16x16xf32>
    %1 = vector.shape_cast %0 : vector<1x3x16x16xf32> to vector<3x16x16xf32>
    %c0_3 = arith.constant 0 : index
    %c0_4 = arith.constant 0 : index
    %c0_5 = arith.constant 0 : index
    %c0_6 = arith.constant 0 : index
    %2 = vector.load %arg2[%c0_3, %c0_4, %c0_5, %c0_6] : memref<1x3x16x16xf32, #tpu.memory_space<vmem>>, vector<1x3x16x16xf32>
    %3 = vector.shape_cast %2 : vector<1x3x16x16xf32> to vector<3x16x16xf32>
    %4 = vector.extract_strided_slice %1 {offsets = [0, 1, 0], sizes = [3, 15, 16], strides = [1, 1, 1]} : vector<3x16x16xf32> to vector<3x15x16xf32>
    %5 = vector.extract_strided_slice %1 {offsets = [0, 0, 0], sizes = [3, 15, 16], strides = [1, 1, 1]} : vector<3x16x16xf32> to vector<3x15x16xf32>
    %6 = arith.subf %4, %5 : vector<3x15x16xf32>
    %cst = arith.constant 9.99999997E-7 : f32
    %7 = vector.broadcast %cst : f32 to vector<3x15x16xf32>
    %8 = arith.addf %6, %7 : vector<3x15x16xf32>
    %9 = vector.extract_strided_slice %1 {offsets = [0, 0, 1], sizes = [3, 16, 15], strides = [1, 1, 1]} : vector<3x16x16xf32> to vector<3x16x15xf32>
    %10 = vector.extract_strided_slice %1 {offsets = [0, 0, 0], sizes = [3, 16, 15], strides = [1, 1, 1]} : vector<3x16x16xf32> to vector<3x16x15xf32>
    %11 = arith.subf %9, %10 : vector<3x16x15xf32>
    %cst_7 = arith.constant 9.99999997E-7 : f32
    %12 = vector.broadcast %cst_7 : f32 to vector<3x16x15xf32>
    %13 = arith.addf %11, %12 : vector<3x16x15xf32>
    %14 = vector.extract_strided_slice %3 {offsets = [0, 1, 0], sizes = [3, 15, 16], strides = [1, 1, 1]} : vector<3x16x16xf32> to vector<3x15x16xf32>
    %15 = vector.extract_strided_slice %3 {offsets = [0, 0, 0], sizes = [3, 15, 16], strides = [1, 1, 1]} : vector<3x16x16xf32> to vector<3x15x16xf32>
    %16 = arith.subf %14, %15 : vector<3x15x16xf32>
    %cst_8 = arith.constant 9.99999997E-7 : f32
    %17 = vector.broadcast %cst_8 : f32 to vector<3x15x16xf32>
    %18 = arith.addf %16, %17 : vector<3x15x16xf32>
    %19 = vector.extract_strided_slice %3 {offsets = [0, 0, 1], sizes = [3, 16, 15], strides = [1, 1, 1]} : vector<3x16x16xf32> to vector<3x16x15xf32>
    %20 = vector.extract_strided_slice %3 {offsets = [0, 0, 0], sizes = [3, 16, 15], strides = [1, 1, 1]} : vector<3x16x16xf32> to vector<3x16x15xf32>
    %21 = arith.subf %19, %20 : vector<3x16x15xf32>
    %cst_9 = arith.constant 9.99999997E-7 : f32
    %22 = vector.broadcast %cst_9 : f32 to vector<3x16x15xf32>
    %23 = arith.addf %21, %22 : vector<3x16x15xf32>
    %cst_10 = arith.constant 5.000000e-01 : f32
    %24 = vector.broadcast %cst_10 : f32 to vector<3x15x16xf32>
    %25 = arith.mulf %8, %24 : vector<3x15x16xf32>
    %26 = math.tanh %25 : vector<3x15x16xf32>
    %27 = arith.mulf %26, %26 : vector<3x15x16xf32>
    %cst_11 = arith.constant 5.000000e-01 : f32
    %28 = vector.broadcast %cst_11 : f32 to vector<3x15x16xf32>
    %29 = arith.mulf %18, %28 : vector<3x15x16xf32>
    %30 = math.tanh %29 : vector<3x15x16xf32>
    %31 = arith.mulf %30, %30 : vector<3x15x16xf32>
    %cst_12 = arith.constant 5.000000e-01 : f32
    %32 = vector.broadcast %cst_12 : f32 to vector<3x16x15xf32>
    %33 = arith.mulf %13, %32 : vector<3x16x15xf32>
    %34 = math.tanh %33 : vector<3x16x15xf32>
    %35 = arith.mulf %34, %34 : vector<3x16x15xf32>
    %cst_13 = arith.constant 5.000000e-01 : f32
    %36 = vector.broadcast %cst_13 : f32 to vector<3x16x15xf32>
    %37 = arith.mulf %23, %36 : vector<3x16x15xf32>
    %38 = math.tanh %37 : vector<3x16x15xf32>
    %39 = arith.mulf %38, %38 : vector<3x16x15xf32>
    %40 = vector.shape_cast %27 : vector<3x15x16xf32> to vector<3x1x15x16xf32>
    %41 = vector.shape_cast %31 : vector<3x15x16xf32> to vector<1x3x15x16xf32>
    %42 = vector.broadcast %40 : vector<3x1x15x16xf32> to vector<3x3x15x16xf32>
    %43 = vector.broadcast %41 : vector<1x3x15x16xf32> to vector<3x3x15x16xf32>
    %44 = arith.mulf %42, %43 : vector<3x3x15x16xf32>
    %cst_14 = arith.constant dense<0.000000e+00> : vector<3x3x15xf32>
    %45 = vector.multi_reduction <add>, %44, %cst_14 [3] : vector<3x3x15x16xf32> to vector<3x3x15xf32>
    %cst_15 = arith.constant dense<0.000000e+00> : vector<3x3xf32>
    %46 = vector.multi_reduction <add>, %45, %cst_15 [2] : vector<3x3x15xf32> to vector<3x3xf32>
    %c0_16 = arith.constant 0 : index
    %c0_17 = arith.constant 0 : index
    %c0_18 = arith.constant 0 : index
    %47 = vector.load %arg3[%c0_16, %c0_17, %c0_18] : memref<1x3x3xf32, #tpu.memory_space<vmem>>, vector<1x3x3xf32>
    %48 = vector.shape_cast %47 : vector<1x3x3xf32> to vector<3x3xf32>
    %49 = vector.shape_cast %46 : vector<3x3xf32> to vector<1x3x3xf32>
    tpu.vector_store %arg3[%c0_16, %c0_17, %c0_18], %49 {strides = array<i32>} : memref<1x3x3xf32, #tpu.memory_space<vmem>>, vector<1x3x3xf32>,
    %50 = vector.shape_cast %35 : vector<3x16x15xf32> to vector<3x1x16x15xf32>
    %51 = vector.shape_cast %39 : vector<3x16x15xf32> to vector<1x3x16x15xf32>
    %52 = vector.broadcast %50 : vector<3x1x16x15xf32> to vector<3x3x16x15xf32>
    %53 = vector.broadcast %51 : vector<1x3x16x15xf32> to vector<3x3x16x15xf32>
    %54 = arith.mulf %52, %53 : vector<3x3x16x15xf32>
    %cst_19 = arith.constant dense<0.000000e+00> : vector<3x3x16xf32>
    %55 = vector.multi_reduction <add>, %54, %cst_19 [3] : vector<3x3x16x15xf32> to vector<3x3x16xf32>
    %cst_20 = arith.constant dense<0.000000e+00> : vector<3x3xf32>
    %56 = vector.multi_reduction <add>, %55, %cst_20 [2] : vector<3x3x16xf32> to vector<3x3xf32>
    %c0_21 = arith.constant 0 : index
    %c0_22 = arith.constant 0 : index
    %c0_23 = arith.constant 0 : index
    %57 = vector.load %arg4[%c0_21, %c0_22, %c0_23] : memref<1x3x3xf32, #tpu.memory_space<vmem>>, vector<1x3x3xf32>
    %58 = vector.shape_cast %57 : vector<1x3x3xf32> to vector<3x3xf32>
    %59 = vector.shape_cast %56 : vector<3x3xf32> to vector<1x3x3xf32>
    tpu.vector_store %arg4[%c0_21, %c0_22, %c0_23], %59 {strides = array<i32>} : memref<1x3x3xf32, #tpu.memory_space<vmem>>, vector<1x3x3xf32>,
    return
  }
  func.func @transform_0(%arg0: i32) -> (i32, i32, i32, i32) {
    %c0_i32 = arith.constant 0 : i32
    %c0_i32_0 = arith.constant 0 : i32
    %c0_i32_1 = arith.constant 0 : i32
    %c0_i32_2 = arith.constant 0 : i32
    return %arg0, %c0_i32, %c0_i32_0, %c0_i32_1 : i32, i32, i32, i32
  }
  func.func @transform_1(%arg0: i32) -> (i32, i32, i32, i32) {
    %c0_i32 = arith.constant 0 : i32
    %c0_i32_0 = arith.constant 0 : i32
    %c0_i32_1 = arith.constant 0 : i32
    %c0_i32_2 = arith.constant 0 : i32
    return %arg0, %c0_i32, %c0_i32_0, %c0_i32_1 : i32, i32, i32, i32
  }
  func.func @transform_2(%arg0: i32) -> (i32, i32, i32) {
    %c0_i32 = arith.constant 0 : i32
    %c0_i32_0 = arith.constant 0 : i32
    %c0_i32_1 = arith.constant 0 : i32
    return %arg0, %c0_i32, %c0_i32_0 : i32, i32, i32
  }
  func.func @transform_3(%arg0: i32) -> (i32, i32, i32) {
    %c0_i32 = arith.constant 0 : i32
    %c0_i32_0 = arith.constant 0 : i32
    %c0_i32_1 = arith.constant 0 : i32
    return %arg0, %c0_i32, %c0_i32_0 : i32, i32, i32
  }
}

module attributes {stable_mosaic.version = 11 : i64} {
  func.func @_exclusion_level_kernel(%arg0: i32, %arg1: memref<1x3x4x4xf32, #tpu.memory_space<vmem>>, %arg2: memref<1x3x4x4xf32, #tpu.memory_space<vmem>>, %arg3: memref<1x3x3xf32, #tpu.memory_space<vmem>>, %arg4: memref<1x3x3xf32, #tpu.memory_space<vmem>>) attributes {dimension_semantics = [#tpu.dimension_semantics<parallel>], iteration_bounds = array<i64: 2>, scalar_prefetch = 0 : i64, scratch_operands = 0 : i64, tpu.core_type = #tpu.core_type<tc>, window_params = [{transform_indices = @transform_0, window_bounds = array<i64: 1, 3, 4, 4>}, {transform_indices = @transform_1, window_bounds = array<i64: 1, 3, 4, 4>}, {transform_indices = @transform_2, window_bounds = array<i64: 1, 3, 3>}, {transform_indices = @transform_3, window_bounds = array<i64: 1, 3, 3>}]} {
    %c0 = arith.constant 0 : index
    %c0_0 = arith.constant 0 : index
    %c0_1 = arith.constant 0 : index
    %c0_2 = arith.constant 0 : index
    %0 = vector.load %arg1[%c0, %c0_0, %c0_1, %c0_2] : memref<1x3x4x4xf32, #tpu.memory_space<vmem>>, vector<1x3x4x4xf32>
    %1 = vector.shape_cast %0 : vector<1x3x4x4xf32> to vector<3x4x4xf32>
    %c0_3 = arith.constant 0 : index
    %c0_4 = arith.constant 0 : index
    %c0_5 = arith.constant 0 : index
    %c0_6 = arith.constant 0 : index
    %2 = vector.load %arg2[%c0_3, %c0_4, %c0_5, %c0_6] : memref<1x3x4x4xf32, #tpu.memory_space<vmem>>, vector<1x3x4x4xf32>
    %3 = vector.shape_cast %2 : vector<1x3x4x4xf32> to vector<3x4x4xf32>
    %4 = vector.extract_strided_slice %1 {offsets = [0, 1, 0], sizes = [3, 3, 4], strides = [1, 1, 1]} : vector<3x4x4xf32> to vector<3x3x4xf32>
    %5 = vector.extract_strided_slice %1 {offsets = [0, 0, 0], sizes = [3, 3, 4], strides = [1, 1, 1]} : vector<3x4x4xf32> to vector<3x3x4xf32>
    %6 = arith.subf %4, %5 : vector<3x3x4xf32>
    %cst = arith.constant 9.99999997E-7 : f32
    %7 = vector.broadcast %cst : f32 to vector<3x3x4xf32>
    %8 = arith.addf %6, %7 : vector<3x3x4xf32>
    %9 = vector.extract_strided_slice %1 {offsets = [0, 0, 1], sizes = [3, 4, 3], strides = [1, 1, 1]} : vector<3x4x4xf32> to vector<3x4x3xf32>
    %10 = vector.extract_strided_slice %1 {offsets = [0, 0, 0], sizes = [3, 4, 3], strides = [1, 1, 1]} : vector<3x4x4xf32> to vector<3x4x3xf32>
    %11 = arith.subf %9, %10 : vector<3x4x3xf32>
    %cst_7 = arith.constant 9.99999997E-7 : f32
    %12 = vector.broadcast %cst_7 : f32 to vector<3x4x3xf32>
    %13 = arith.addf %11, %12 : vector<3x4x3xf32>
    %14 = vector.extract_strided_slice %3 {offsets = [0, 1, 0], sizes = [3, 3, 4], strides = [1, 1, 1]} : vector<3x4x4xf32> to vector<3x3x4xf32>
    %15 = vector.extract_strided_slice %3 {offsets = [0, 0, 0], sizes = [3, 3, 4], strides = [1, 1, 1]} : vector<3x4x4xf32> to vector<3x3x4xf32>
    %16 = arith.subf %14, %15 : vector<3x3x4xf32>
    %cst_8 = arith.constant 9.99999997E-7 : f32
    %17 = vector.broadcast %cst_8 : f32 to vector<3x3x4xf32>
    %18 = arith.addf %16, %17 : vector<3x3x4xf32>
    %19 = vector.extract_strided_slice %3 {offsets = [0, 0, 1], sizes = [3, 4, 3], strides = [1, 1, 1]} : vector<3x4x4xf32> to vector<3x4x3xf32>
    %20 = vector.extract_strided_slice %3 {offsets = [0, 0, 0], sizes = [3, 4, 3], strides = [1, 1, 1]} : vector<3x4x4xf32> to vector<3x4x3xf32>
    %21 = arith.subf %19, %20 : vector<3x4x3xf32>
    %cst_9 = arith.constant 9.99999997E-7 : f32
    %22 = vector.broadcast %cst_9 : f32 to vector<3x4x3xf32>
    %23 = arith.addf %21, %22 : vector<3x4x3xf32>
    %cst_10 = arith.constant 5.000000e-01 : f32
    %24 = vector.broadcast %cst_10 : f32 to vector<3x3x4xf32>
    %25 = arith.mulf %8, %24 : vector<3x3x4xf32>
    %26 = math.tanh %25 : vector<3x3x4xf32>
    %27 = arith.mulf %26, %26 : vector<3x3x4xf32>
    %cst_11 = arith.constant 5.000000e-01 : f32
    %28 = vector.broadcast %cst_11 : f32 to vector<3x3x4xf32>
    %29 = arith.mulf %18, %28 : vector<3x3x4xf32>
    %30 = math.tanh %29 : vector<3x3x4xf32>
    %31 = arith.mulf %30, %30 : vector<3x3x4xf32>
    %cst_12 = arith.constant 5.000000e-01 : f32
    %32 = vector.broadcast %cst_12 : f32 to vector<3x4x3xf32>
    %33 = arith.mulf %13, %32 : vector<3x4x3xf32>
    %34 = math.tanh %33 : vector<3x4x3xf32>
    %35 = arith.mulf %34, %34 : vector<3x4x3xf32>
    %cst_13 = arith.constant 5.000000e-01 : f32
    %36 = vector.broadcast %cst_13 : f32 to vector<3x4x3xf32>
    %37 = arith.mulf %23, %36 : vector<3x4x3xf32>
    %38 = math.tanh %37 : vector<3x4x3xf32>
    %39 = arith.mulf %38, %38 : vector<3x4x3xf32>
    %40 = vector.shape_cast %27 : vector<3x3x4xf32> to vector<3x1x3x4xf32>
    %41 = vector.shape_cast %31 : vector<3x3x4xf32> to vector<1x3x3x4xf32>
    %42 = vector.broadcast %40 : vector<3x1x3x4xf32> to vector<3x3x3x4xf32>
    %43 = vector.broadcast %41 : vector<1x3x3x4xf32> to vector<3x3x3x4xf32>
    %44 = arith.mulf %42, %43 : vector<3x3x3x4xf32>
    %cst_14 = arith.constant dense<0.000000e+00> : vector<3x3x3xf32>
    %45 = vector.multi_reduction <add>, %44, %cst_14 [3] : vector<3x3x3x4xf32> to vector<3x3x3xf32>
    %cst_15 = arith.constant dense<0.000000e+00> : vector<3x3xf32>
    %46 = vector.multi_reduction <add>, %45, %cst_15 [2] : vector<3x3x3xf32> to vector<3x3xf32>
    %c0_16 = arith.constant 0 : index
    %c0_17 = arith.constant 0 : index
    %c0_18 = arith.constant 0 : index
    %47 = vector.load %arg3[%c0_16, %c0_17, %c0_18] : memref<1x3x3xf32, #tpu.memory_space<vmem>>, vector<1x3x3xf32>
    %48 = vector.shape_cast %47 : vector<1x3x3xf32> to vector<3x3xf32>
    %49 = vector.shape_cast %46 : vector<3x3xf32> to vector<1x3x3xf32>
    tpu.vector_store %arg3[%c0_16, %c0_17, %c0_18], %49 {strides = array<i32>} : memref<1x3x3xf32, #tpu.memory_space<vmem>>, vector<1x3x3xf32>,
    %50 = vector.shape_cast %35 : vector<3x4x3xf32> to vector<3x1x4x3xf32>
    %51 = vector.shape_cast %39 : vector<3x4x3xf32> to vector<1x3x4x3xf32>
    %52 = vector.broadcast %50 : vector<3x1x4x3xf32> to vector<3x3x4x3xf32>
    %53 = vector.broadcast %51 : vector<1x3x4x3xf32> to vector<3x3x4x3xf32>
    %54 = arith.mulf %52, %53 : vector<3x3x4x3xf32>
    %cst_19 = arith.constant dense<0.000000e+00> : vector<3x3x4xf32>
    %55 = vector.multi_reduction <add>, %54, %cst_19 [3] : vector<3x3x4x3xf32> to vector<3x3x4xf32>
    %cst_20 = arith.constant dense<0.000000e+00> : vector<3x3xf32>
    %56 = vector.multi_reduction <add>, %55, %cst_20 [2] : vector<3x3x4xf32> to vector<3x3xf32>
    %c0_21 = arith.constant 0 : index
    %c0_22 = arith.constant 0 : index
    %c0_23 = arith.constant 0 : index
    %57 = vector.load %arg4[%c0_21, %c0_22, %c0_23] : memref<1x3x3xf32, #tpu.memory_space<vmem>>, vector<1x3x3xf32>
    %58 = vector.shape_cast %57 : vector<1x3x3xf32> to vector<3x3xf32>
    %59 = vector.shape_cast %56 : vector<3x3xf32> to vector<1x3x3xf32>
    tpu.vector_store %arg4[%c0_21, %c0_22, %c0_23], %59 {strides = array<i32>} : memref<1x3x3xf32, #tpu.memory_space<vmem>>, vector<1x3x3xf32>,
    return
  }
  func.func @transform_0(%arg0: i32) -> (i32, i32, i32, i32) {
    %c0_i32 = arith.constant 0 : i32
    %c0_i32_0 = arith.constant 0 : i32
    %c0_i32_1 = arith.constant 0 : i32
    %c0_i32_2 = arith.constant 0 : i32
    return %arg0, %c0_i32, %c0_i32_0, %c0_i32_1 : i32, i32, i32, i32
  }
  func.func @transform_1(%arg0: i32) -> (i32, i32, i32, i32) {
    %c0_i32 = arith.constant 0 : i32
    %c0_i32_0 = arith.constant 0 : i32
    %c0_i32_1 = arith.constant 0 : i32
    %c0_i32_2 = arith.constant 0 : i32
    return %arg0, %c0_i32, %c0_i32_0, %c0_i32_1 : i32, i32, i32, i32
  }
  func.func @transform_2(%arg0: i32) -> (i32, i32, i32) {
    %c0_i32 = arith.constant 0 : i32
    %c0_i32_0 = arith.constant 0 : i32
    %c0_i32_1 = arith.constant 0 : i32
    return %arg0, %c0_i32, %c0_i32_0 : i32, i32, i32
  }
  func.func @transform_3(%arg0: i32) -> (i32, i32, i32) {
    %c0_i32 = arith.constant 0 : i32
    %c0_i32_0 = arith.constant 0 : i32
    %c0_i32_1 = arith.constant 0 : i32
    return %arg0, %c0_i32, %c0_i32_0 : i32, i32, i32
  }
}

</mosaic_0001>

<llo_original>
// kernel: exclusion_loss.4
$region0: #{exclusion_loss.4}
  #allocation0 [shape = 'u32[]', space=smem, size = 0x4, offset = 0x4, fixed_abs, tag = 'smem constant byte address 0x4 - core index']
  #allocation1 [shape = 'u32[144,128]{1,0:T(1,128)}', space=vmem, size = 0x12000, scoped, tag = 'internal scratch']
  %s0 = inlined_call_operand.vmem [shape: f32[2,3,8,8], index: 0, kind: input, shape index: {}]
  %s1 = inlined_call_operand.vmem [shape: f32[2,3,8,8], index: 1, kind: input, shape index: {}]
  %s2 = inlined_call_operand.vmem [shape: f32[2,3,3], index: 2, kind: output, shape index: {0}]
  %s3 = inlined_call_operand.vmem [shape: f32[2,3,3], index: 3, kind: output, shape index: {1}]
  %4 = xla_tuple %s2, %s3
  %s5 = sld [smem:[#allocation0]]
  $region49: #{exclusion_loss.4} parent=0
    _
  %s7 = ssub.s32 1, %s5
  %s8 = scalar_select 0, %s7, %s5
  loop: start=0, step=1, limit=4
  $region2: #{exclusion_loss.4} parent=0 // loop_pre_header
    _
  $region3: #{exclusion_loss.4} parent=0 // loop_header
    %s10 = sphi 0, %s14
    %p11 = scmp.ge.s32.totalorder %s10, 4
    %s20 = sphi 0, %s22
    %s23 = sphi 0, %s20
    %s24 = sphi 0, %s23
    %s40 = sphi 0, %s24
    %s46 = sphi 0, %s48
    %s49 = sphi 0, %s46
    %s50 = sphi 0, %s49
    %s66 = sphi 0, %s50
    %s72 = sphi 0, %s74
    %s75 = sphi 0, %s72
    %s76 = sphi 0, %s75
    %s92 = sphi 0, %s76
    %s98 = sphi 0, %s100
    %s101 = sphi 0, %s98
    %s102 = sphi 0, %s101
    %s118 = sphi 0, %s102
  $region4: #{exclusion_loss.4} parent=0 // loop_header_branch
    %13 = sbr.rel (%p11) target = $region8
  $region5: #{exclusion_loss.4} parent=0 // loop_body
    %s15 = ssub.s32 %s10, 1
    %s16 = ssub.s32 %s10, 2
    %s17 = sadd.s32 %s10, 1
    %s18 = ssub.s32 %s10, %s17
    %p19 = scmp.eq.s32.totalorder %s18, 0
    %s21 = sadd.s32 %s20, 1
    %s22 = scalar_select %p19, %s20, %s21
    %p25 = pneg %p19
    %p26 = scmp.eq.s32.totalorder %s10, 1
    %p27 = por %p25, %p26
    %p28 = scmp.ne.s32.totalorder %s20, %s23
    %p29 = scmp.eq.s32.totalorder %s10, 0
    %p30 = por %p28, %p29
    %p31 = scmp.ne.s32.totalorder %s20, %s23
    %p32 = scmp.eq.s32.totalorder %s15, 1
    %p33 = por %p31, %p32
    %p34 = scmp.ne.s32.totalorder %s23, %s24
    %p35 = scmp.eq.s32.totalorder %s15, 0
    %p36 = por %p34, %p35
    %p37 = scmp.ne.s32.totalorder %s23, %s24
    %p38 = scmp.eq.s32.totalorder %s16, 1
    %p39 = por %p37, %p38
    %p41 = scmp.ne.s32.totalorder %s24, %s40
    %p42 = scmp.eq.s32.totalorder %s16, 0
    %p43 = por %p41, %p42
    %s44 = ssub.s32 %s10, %s17
    %p45 = scmp.eq.s32.totalorder %s44, 0
    %s47 = sadd.s32 %s46, 1
    %s48 = scalar_select %p45, %s46, %s47
    %p51 = pneg %p45
    %p52 = scmp.eq.s32.totalorder %s10, 1
    %p53 = por %p51, %p52
    %p54 = scmp.ne.s32.totalorder %s46, %s49
    %p55 = scmp.eq.s32.totalorder %s10, 0
    %p56 = por %p54, %p55
    %p57 = scmp.ne.s32.totalorder %s46, %s49
    %p58 = scmp.eq.s32.totalorder %s15, 1
    %p59 = por %p57, %p58
    %p60 = scmp.ne.s32.totalorder %s49, %s50
    %p61 = scmp.eq.s32.totalorder %s15, 0
    %p62 = por %p60, %p61
    %p63 = scmp.ne.s32.totalorder %s49, %s50
    %p64 = scmp.eq.s32.totalorder %s16, 1
    %p65 = por %p63, %p64
    %p67 = scmp.ne.s32.totalorder %s50, %s66
    %p68 = scmp.eq.s32.totalorder %s16, 0
    %p69 = por %p67, %p68
    %s70 = ssub.s32 %s10, %s17
    %p71 = scmp.eq.s32.totalorder %s70, 0
    %s73 = sadd.s32 %s72, 1
    %s74 = scalar_select %p71, %s72, %s73
    %p77 = pneg %p71
    %p78 = scmp.eq.s32.totalorder %s10, 1
    %p79 = por %p77, %p78
    %p80 = scmp.ne.s32.totalorder %s72, %s75
    %p81 = scmp.eq.s32.totalorder %s10, 0
    %p82 = por %p80, %p81
    %p83 = scmp.ne.s32.totalorder %s72, %s75
    %p84 = scmp.eq.s32.totalorder %s15, 1
    %p85 = por %p83, %p84
    %p86 = scmp.ne.s32.totalorder %s75, %s76
    %p87 = scmp.eq.s32.totalorder %s15, 0
    %p88 = por %p86, %p87
    %p89 = scmp.ne.s32.totalorder %s75, %s76
    %p90 = scmp.eq.s32.totalorder %s16, 1
    %p91 = por %p89, %p90
    %p93 = scmp.ne.s32.totalorder %s76, %s92
    %p94 = scmp.eq.s32.totalorder %s16, 0
    %p95 = por %p93, %p94
    %s96 = ssub.s32 %s10, %s17
    %p97 = scmp.eq.s32.totalorder %s96, 0
    %s99 = sadd.s32 %s98, 1
    %s100 = scalar_select %p97, %s98, %s99
    %p103 = pneg %p97
    %p104 = scmp.eq.s32.totalorder %s10, 1
    %p105 = por %p103, %p104
    %p106 = scmp.ne.s32.totalorder %s98, %s101
    %p107 = scmp.eq.s32.totalorder %s10, 0
    %p108 = por %p106, %p107
    %p109 = scmp.ne.s32.totalorder %s98, %s101
    %p110 = scmp.eq.s32.totalorder %s15, 1
    %p111 = por %p109, %p110
    %p112 = scmp.ne.s32.totalorder %s101, %s102
    %p113 = scmp.eq.s32.totalorder %s15, 0
    %p114 = por %p112, %p113
    %p115 = scmp.ne.s32.totalorder %s101, %s102
    %p116 = scmp.eq.s32.totalorder %s16, 1
    %p117 = por %p115, %p116
    %p119 = scmp.ne.s32.totalorder %s102, %s118
    %p120 = scmp.eq.s32.totalorder %s16, 0
    %p121 = por %p119, %p120
    %p122 = scmp.le.s32.totalorder 1, %s10
    %p123 = scmp.lt.s32.totalorder %s10, 3
    %p124 = pnand %p122, %p123
    %p125 = pneg %p124
    // Predicated region
    $region9: #{exclusion_loss.4} parent=5 // pred_check
      _
    $region10: #{exclusion_loss.4} parent=5 // pred_check_branch
      %127 = sbr.rel (%p124) target = $region12
    $region11: #{exclusion_loss.4} parent=5 // pred_region
      %s128 = ssub.s32 %s10, 1
    $region12: #{exclusion_loss.4} parent=5 // pred_fallthru
      _
    %p129 = scmp.lt.s32.totalorder %s10, 2
    // Predicated region
    $region13: #{exclusion_loss.4} parent=5 // pred_check
      %p130 = pneg %p129
    $region14: #{exclusion_loss.4} parent=5 // pred_check_branch
      %132 = sbr.rel (%p130) target = $region16
    $region15: #{exclusion_loss.4} parent=5 // pred_region
      // Predicated region
      $region17: #{exclusion_loss.4} parent=15 // pred_check
        %p133 = pneg %p30
      $region18: #{exclusion_loss.4} parent=15 // pred_check_branch
        %135 = sbr.rel (%p133) target = $region20
      $region19: #{exclusion_loss.4} parent=15 // pred_region
        %p136 = scmp.lt.s32.totalorder %s10, 1
        %s137 = scalar_select %p136, %s10, 1
        %s138 = smul.addr %s137, 3
        %s139 = smul.addr %s138, 8
        %s140 = scalar_lea.vmem %s0, %s139
      $region20: #{exclusion_loss.4} parent=15 // pred_fallthru
        _
      // Predicated region
      $region21: #{exclusion_loss.4} parent=15 // pred_check
        %p141 = pneg %p56
      $region22: #{exclusion_loss.4} parent=15 // pred_check_branch
        %143 = sbr.rel (%p141) target = $region24
      $region23: #{exclusion_loss.4} parent=15 // pred_region
        %p144 = scmp.lt.s32.totalorder %s10, 1
        %s145 = scalar_select %p144, %s10, 1
        %s146 = smul.addr %s145, 3
        %s147 = smul.addr %s146, 8
        %s148 = scalar_lea.vmem %s1, %s147
      $region24: #{exclusion_loss.4} parent=15 // pred_fallthru
        _
    $region16: #{exclusion_loss.4} parent=5 // pred_fallthru
      _
    %p149 = scmp.le.s32.totalorder 1, %s10
    %p150 = scmp.lt.s32.totalorder %s10, 3
    %p151 = pnand %p149, %p150
    %p152 = pneg %p151
    // Predicated region
    $region25: #{exclusion_loss.4} parent=5 // pred_check
      _
    $region26: #{exclusion_loss.4} parent=5 // pred_check_branch
      %154 = sbr.rel (%p151) target = $region28
    $region27: #{exclusion_loss.4} parent=5 // pred_region
      %s155 = ssub.s32 %s10, 1
      %p156 = scmp.lt.s32.totalorder %s15, 1
      %s157 = scalar_select %p156, %s15, 1
      %s158 = smul.addr %s157, 3
      %s159 = smul.addr %s158, 8
      %s160 = scalar_lea.vmem %s0, %s159
      %p161 = pneg %p36
      %p162 = pneg %p33
      %p163 = scmp.lt.s32.totalorder %s15, 1
      %s164 = scalar_select %p163, %s15, 1
      %s165 = smul.addr %s164, 3
      %s166 = smul.addr %s165, 8
      %s167 = scalar_lea.vmem %s1, %s166
      %p168 = pneg %p62
      %p169 = pneg %p59
      %p170 = pneg %p88
      %p171 = pneg %p85
      %p172 = scmp.lt.s32.totalorder %s15, 1
      %s173 = scalar_select %p172, %s15, 1
      %s174 = smul.addr %s173, 4
      %s175 = scalar_lea.vmem %s2, %s174
      %p176 = pneg %p114
      %p177 = pneg %p111
      %p178 = scmp.lt.s32.totalorder %s15, 1
      %s179 = scalar_select %p178, %s15, 1
      %s180 = smul.addr %s179, 4
      %s181 = scalar_lea.vmem %s3, %s180
      %p182 = scmp.lt.s32.totalorder %s15, 1
      %s183 = scalar_select %p182, %s15, 1
      %s184 = smul.addr %s183, 3
      %s185 = smul.addr %s184, 8
      %s186 = scalar_lea.vmem %s0, %s185
      %p187 = scmp.lt.s32.totalorder %s15, 1
      %s188 = scalar_select %p187, %s15, 1
      %s189 = smul.addr %s188, 3
      %s190 = smul.addr %s189, 8
      %s191 = scalar_lea.vmem %s1, %s190
      %p192 = scmp.lt.s32.totalorder %s15, 1
      %s193 = scalar_select %p192, %s15, 1
      %s194 = smul.addr %s193, 4
      %s195 = scalar_lea.vmem %s2, %s194
      %p196 = scmp.lt.s32.totalorder %s15, 1
      %s197 = scalar_select %p196, %s15, 1
      %s198 = smul.addr %s197, 4
      %s199 = scalar_lea.vmem %s3, %s198
      %v200 = vld [vmem:[%s186] sm:$0xff]
      %v201 = vld [vmem:[%s186 + $0x8] sm:$0xff]
      %v202 = vld [vmem:[%s186 + $0x10] sm:$0xff]
      %v203 = vld [vmem:[%s191] sm:$0xff]
      %v204 = vld [vmem:[%s191 + $0x8] sm:$0xff]
      %v205 = vld [vmem:[%s191 + $0x10] sm:$0xff]
      %v209 = vrot.slane %v200, 7
      %v210 = vrot.slane %v201, 7
      %v211 = vrot.slane %v202, 7
      %v215 = vsub.f32 %v200, %v209
      %v216 = vsub.f32 %v201, %v210
      %v217 = vsub.f32 %v202, %v211
      %v218 = vadd.f32 %v215, 1e-06
      %v219 = vadd.f32 %v216, 1e-06
      %v220 = vadd.f32 %v217, 1e-06
      %221 = vrot.lane.b32.xlu0 %v200, 1
      %v222 = vpop.permute.xlu0 %221
      %223 = vrot.lane.b32.xlu0 %v201, 1
      %v224 = vpop.permute.xlu0 %223
      %225 = vrot.lane.b32.xlu0 %v202, 1
      %v226 = vpop.permute.xlu0 %225
      %v230 = vsub.f32 %v200, %v222
      %v231 = vsub.f32 %v201, %v224
      %v232 = vsub.f32 %v202, %v226
      %v233 = vadd.f32 %v230, 1e-06
      %v234 = vadd.f32 %v231, 1e-06
      %v235 = vadd.f32 %v232, 1e-06
      %v239 = vrot.slane %v203, 7
      %v240 = vrot.slane %v204, 7
      %v241 = vrot.slane %v205, 7
      %v245 = vsub.f32 %v203, %v239
      %v246 = vsub.f32 %v204, %v240
      %v247 = vsub.f32 %v205, %v241
      %v248 = vadd.f32 %v245, 1e-06
      %v249 = vadd.f32 %v246, 1e-06
      %v250 = vadd.f32 %v247, 1e-06
      %251 = vrot.lane.b32.xlu0 %v203, 1
      %v252 = vpop.permute.xlu0 %251
      %253 = vrot.lane.b32.xlu0 %v204, 1
      %v254 = vpop.permute.xlu0 %253
      %255 = vrot.lane.b32.xlu0 %v205, 1
      %v256 = vpop.permute.xlu0 %255
      %v260 = vsub.f32 %v203, %v252
      %v261 = vsub.f32 %v204, %v254
      %v262 = vsub.f32 %v205, %v256
      %v263 = vadd.f32 %v260, 1e-06
      %v264 = vadd.f32 %v261, 1e-06
      %v265 = vadd.f32 %v262, 1e-06
      %v266 = vmul.f32 %v218, 0.5
      %v267 = vmul.f32 %v219, 0.5
      %v268 = vmul.f32 %v220, 0.5
      %v269 = vtanh.pop %v266
      %v270 = vtanh.pop %v267
      %v271 = vtanh.pop %v268
      %v272 = vmul.f32 %v269, %v269
      %v273 = vmul.f32 %v270, %v270
      %v274 = vmul.f32 %v271, %v271
      %v275 = vmul.f32 %v248, 0.5
      %v276 = vmul.f32 %v249, 0.5
      %v277 = vmul.f32 %v250, 0.5
      %v278 = vtanh.pop %v275
      %v279 = vtanh.pop %v276
      %v280 = vtanh.pop %v277
      %v281 = vmul.f32 %v278, %v278
      %v282 = vmul.f32 %v279, %v279
      %v283 = vmul.f32 %v280, %v280
      %v284 = vmul.f32 %v233, 0.5
      %v285 = vmul.f32 %v234, 0.5
      %v286 = vmul.f32 %v235, 0.5
      %v287 = vtanh.pop %v284
      %v288 = vtanh.pop %v285
      %v289 = vtanh.pop %v286
      %v290 = vmul.f32 %v287, %v287
      %v291 = vmul.f32 %v288, %v288
      %v292 = vmul.f32 %v289, %v289
      %v293 = vmul.f32 %v263, 0.5
      %v294 = vmul.f32 %v264, 0.5
      %v295 = vmul.f32 %v265, 0.5
      %v296 = vtanh.pop %v293
      %v297 = vtanh.pop %v294
      %v298 = vtanh.pop %v295
      %v299 = vmul.f32 %v296, %v296
      %v300 = vmul.f32 %v297, %v297
      %v301 = vmul.f32 %v298, %v298
      %v302 = vmul.f32 %v272, %v281
      %v303 = vmul.f32 %v272, %v282
      %v304 = vmul.f32 %v272, %v283
      %v305 = vmul.f32 %v273, %v281
      %v306 = vmul.f32 %v273, %v282
      %v307 = vmul.f32 %v273, %v283
      %v308 = vmul.f32 %v274, %v281
      %v309 = vmul.f32 %v274, %v282
      %v310 = vmul.f32 %v274, %v283
      %vm311 = vcmask 64513
      %v312 = vsel %vm311, %v302, 0.0
      %313 = vadd.xlane.f32.xlu0 %v312
      %v314 = vpop.xlane.xlu0 %313
      %v315 = vsel %vm311, %v303, 0.0
      %316 = vadd.xlane.f32.xlu0 %v315
      %v317 = vpop.xlane.xlu0 %316
      %v318 = vsel %vm311, %v304, 0.0
      %319 = vadd.xlane.f32.xlu0 %v318
      %v320 = vpop.xlane.xlu0 %319
      %v321 = vsel %vm311, %v305, 0.0
      %322 = vadd.xlane.f32.xlu0 %v321
      %v323 = vpop.xlane.xlu0 %322
      %v324 = vsel %vm311, %v306, 0.0
      %325 = vadd.xlane.f32.xlu0 %v324
      %v326 = vpop.xlane.xlu0 %325
      %v327 = vsel %vm311, %v307, 0.0
      %328 = vadd.xlane.f32.xlu0 %v327
      %v329 = vpop.xlane.xlu0 %328
      %v330 = vsel %vm311, %v308, 0.0
      %331 = vadd.xlane.f32.xlu0 %v330
      %v332 = vpop.xlane.xlu0 %331
      %v333 = vsel %vm311, %v309, 0.0
      %334 = vadd.xlane.f32.xlu0 %v333
      %v335 = vpop.xlane.xlu0 %334
      %v336 = vsel %vm311, %v310, 0.0
      %337 = vadd.xlane.f32.xlu0 %v336
      %v338 = vpop.xlane.xlu0 %337
      %v348 = vlaneseq
      %v349 = vand.u32 %v348, 127
      %v350 = vadd.s32 %v349, 1
      %v351 = vlaneseq
      %v352 = vshrl.u32 %v351, 7
      %v353 = vsub.s32 %v350, %v352
      %v354 = vrot.slane %v314, %v353
      %v355 = vlaneseq
      %v356 = vshrl.u32 %v355, 7
      %v357 = vsub.s32 %v350, %v356
      %v358 = vrot.slane %v317, %v357
      %v359 = vlaneseq
      %v360 = vshrl.u32 %v359, 7
      %v361 = vsub.s32 %v350, %v360
      %v362 = vrot.slane %v320, %v361
      %v363 = vlaneseq
      %v364 = vshrl.u32 %v363, 7
      %v365 = vsub.s32 %v350, %v364
      %v366 = vrot.slane %v323, %v365
      %v367 = vlaneseq
      %v368 = vshrl.u32 %v367, 7
      %v369 = vsub.s32 %v350, %v368
      %v370 = vrot.slane %v326, %v369
      %v371 = vlaneseq
      %v372 = vshrl.u32 %v371, 7
      %v373 = vsub.s32 %v350, %v372
      %v374 = vrot.slane %v329, %v373
      %v375 = vlaneseq
      %v376 = vshrl.u32 %v375, 7
      %v377 = vsub.s32 %v350, %v376
      %v378 = vrot.slane %v332, %v377
      %v379 = vlaneseq
      %v380 = vshrl.u32 %v379, 7
      %v381 = vsub.s32 %v350, %v380
      %v382 = vrot.slane %v335, %v381
      %v383 = vlaneseq
      %v384 = vshrl.u32 %v383, 7
      %v385 = vsub.s32 %v350, %v384
      %v386 = vrot.slane %v338, %v385
      %vm387 = vcmask 1041409
      %v388 = vsel %vm387, %v358, %v354
      %vm389 = vcmask 1042434
      %v390 = vsel %vm389, %v362, %v388
      %v391 = vsel %vm387, %v370, %v366
      %v392 = vsel %vm389, %v374, %v391
      %v393 = vsel %vm387, %v382, %v378
      %v394 = vsel %vm389, %v386, %v393
      %vm398 = vcmask 51200
      %v399 = vsel %vm398, %v390, 0.0
      %400 = vadd.xlane.f32.xlu0 %v399
      %v401 = vpop.xlane.xlu0 %400
      %v402 = vsel %vm398, %v392, 0.0
      %403 = vadd.xlane.f32.xlu0 %v402
      %v404 = vpop.xlane.xlu0 %403
      %v405 = vsel %vm398, %v394, 0.0
      %406 = vadd.xlane.f32.xlu0 %v405
      %v407 = vpop.xlane.xlu0 %406
      %v411 = vlaneseq
      %v412 = vshrl.u32 %v411, 7
      %v413 = vsub.s32 %v349, %v412
      %v414 = vrot.slane %v401, %v413
      %v415 = vlaneseq
      %v416 = vshrl.u32 %v415, 7
      %v417 = vsub.s32 %v349, %v416
      %v418 = vrot.slane %v404, %v417
      %v419 = vlaneseq
      %v420 = vshrl.u32 %v419, 7
      %v421 = vsub.s32 %v349, %v420
      %v422 = vrot.slane %v407, %v421
      %v423 = vsel %vm387, %v418, %v414
      %v424 = vsel %vm389, %v422, %v423
      %vm426 = vcmask 18432
      %427 = vst.msk [vmem:[%s195] sm:$0x7] %vm426, %v424
      %v428 = vmul.f32 %v290, %v299
      %v429 = vmul.f32 %v290, %v300
      %v430 = vmul.f32 %v290, %v301
      %v431 = vmul.f32 %v291, %v299
      %v432 = vmul.f32 %v291, %v300
      %v433 = vmul.f32 %v291, %v301
      %v434 = vmul.f32 %v292, %v299
      %v435 = vmul.f32 %v292, %v300
      %v436 = vmul.f32 %v292, %v301
      %446 = vrot.lane.b32.xlu0 %v428, 127
      %v447 = vpop.permute.xlu0 %446
      %448 = vrot.lane.b32.xlu0 %v429, 127
      %v449 = vpop.permute.xlu0 %448
      %450 = vrot.lane.b32.xlu0 %v430, 127
      %v451 = vpop.permute.xlu0 %450
      %452 = vrot.lane.b32.xlu0 %v431, 127
      %v453 = vpop.permute.xlu0 %452
      %454 = vrot.lane.b32.xlu0 %v432, 127
      %v455 = vpop.permute.xlu0 %454
      %456 = vrot.lane.b32.xlu0 %v433, 127
      %v457 = vpop.permute.xlu0 %456
      %458 = vrot.lane.b32.xlu0 %v434, 127
      %v459 = vpop.permute.xlu0 %458
      %460 = vrot.lane.b32.xlu0 %v435, 127
      %v461 = vpop.permute.xlu0 %460
      %462 = vrot.lane.b32.xlu0 %v436, 127
      %v463 = vpop.permute.xlu0 %462
      %vm473 = vcmask 56320
      %v474 = vsel %vm473, %v447, 0.0
      %475 = vadd.xlane.f32.xlu0 %v474
      %v476 = vpop.xlane.xlu0 %475
      %v477 = vsel %vm473, %v449, 0.0
      %478 = vadd.xlane.f32.xlu0 %v477
      %v479 = vpop.xlane.xlu0 %478
      %v480 = vsel %vm473, %v451, 0.0
      %481 = vadd.xlane.f32.xlu0 %v480
      %v482 = vpop.xlane.xlu0 %481
      %v483 = vsel %vm473, %v453, 0.0
      %484 = vadd.xlane.f32.xlu0 %v483
      %v485 = vpop.xlane.xlu0 %484
      %v486 = vsel %vm473, %v455, 0.0
      %487 = vadd.xlane.f32.xlu0 %v486
      %v488 = vpop.xlane.xlu0 %487
      %v489 = vsel %vm473, %v457, 0.0
      %490 = vadd.xlane.f32.xlu0 %v489
      %v491 = vpop.xlane.xlu0 %490
      %v492 = vsel %vm473, %v459, 0.0
      %493 = vadd.xlane.f32.xlu0 %v492
      %v494 = vpop.xlane.xlu0 %493
      %v495 = vsel %vm473, %v461, 0.0
      %496 = vadd.xlane.f32.xlu0 %v495
      %v497 = vpop.xlane.xlu0 %496
      %v498 = vsel %vm473, %v463, 0.0
      %499 = vadd.xlane.f32.xlu0 %v498
      %v500 = vpop.xlane.xlu0 %499
      %v510 = vlaneseq
      %v511 = vshrl.u32 %v510, 7
      %v512 = vsub.s32 %v349, %v511
      %v513 = vrot.slane %v476, %v512
      %v514 = vlaneseq
      %v515 = vshrl.u32 %v514, 7
      %v516 = vsub.s32 %v349, %v515
      %v517 = vrot.slane %v479, %v516
      %v518 = vlaneseq
      %v519 = vshrl.u32 %v518, 7
      %v520 = vsub.s32 %v349, %v519
      %v521 = vrot.slane %v482, %v520
      %v522 = vlaneseq
      %v523 = vshrl.u32 %v522, 7
      %v524 = vsub.s32 %v349, %v523
      %v525 = vrot.slane %v485, %v524
      %v526 = vlaneseq
      %v527 = vshrl.u32 %v526, 7
      %v528 = vsub.s32 %v349, %v527
      %v529 = vrot.slane %v488, %v528
      %v530 = vlaneseq
      %v531 = vshrl.u32 %v530, 7
      %v532 = vsub.s32 %v349, %v531
      %v533 = vrot.slane %v491, %v532
      %v534 = vlaneseq
      %v535 = vshrl.u32 %v534, 7
      %v536 = vsub.s32 %v349, %v535
      %v537 = vrot.slane %v494, %v536
      %v538 = vlaneseq
      %v539 = vshrl.u32 %v538, 7
      %v540 = vsub.s32 %v349, %v539
      %v541 = vrot.slane %v497, %v540
      %v542 = vlaneseq
      %v543 = vshrl.u32 %v542, 7
      %v544 = vsub.s32 %v349, %v543
      %v545 = vrot.slane %v500, %v544
      %v546 = vsel %vm387, %v517, %v513
      %v547 = vsel %vm389, %v521, %v546
      %v548 = vsel %vm387, %v529, %v525
      %v549 = vsel %vm389, %v533, %v548
      %v550 = vsel %vm387, %v541, %v537
      %v551 = vsel %vm389, %v545, %v550
      %vm555 = vcmask 59392
      %v556 = vsel %vm555, %v547, 0.0
      %557 = vadd.xlane.f32.xlu0 %v556
      %v558 = vpop.xlane.xlu0 %557
      %v559 = vsel %vm555, %v549, 0.0
      %560 = vadd.xlane.f32.xlu0 %v559
      %v561 = vpop.xlane.xlu0 %560
      %v562 = vsel %vm555, %v551, 0.0
      %563 = vadd.xlane.f32.xlu0 %v562
      %v564 = vpop.xlane.xlu0 %563
      %v568 = vlaneseq
      %v569 = vshrl.u32 %v568, 7
      %v570 = vsub.s32 %v349, %v569
      %v571 = vrot.slane %v558, %v570
      %v572 = vlaneseq
      %v573 = vshrl.u32 %v572, 7
      %v574 = vsub.s32 %v349, %v573
      %v575 = vrot.slane %v561, %v574
      %v576 = vlaneseq
      %v577 = vshrl.u32 %v576, 7
      %v578 = vsub.s32 %v349, %v577
      %v579 = vrot.slane %v564, %v578
      %v580 = vsel %vm387, %v575, %v571
      %v581 = vsel %vm389, %v579, %v580
      %583 = vst.msk [vmem:[%s199] sm:$0x7] %vm426, %v581
      %p584 = scmp.lt.s32.totalorder %s15, 1
      %s585 = scalar_select %p584, %s15, 1
      %s586 = smul.addr %s585, 4
      %s587 = scalar_lea.vmem %s2, %s586
      %p588 = scmp.lt.s32.totalorder %s15, 1
      %s589 = scalar_select %p588, %s15, 1
      %s590 = smul.addr %s589, 4
      %s591 = scalar_lea.vmem %s3, %s590
      // Predicated region
      $region29: #{exclusion_loss.4} parent=27 // pred_check
        %p592 = pneg %p85
      $region30: #{exclusion_loss.4} parent=27 // pred_check_branch
        %594 = sbr.rel (%p592) target = $region32
      $region31: #{exclusion_loss.4} parent=27 // pred_region
        _
      $region32: #{exclusion_loss.4} parent=27 // pred_fallthru
        _
      // Predicated region
      $region33: #{exclusion_loss.4} parent=27 // pred_check
        %p595 = pneg %p111
      $region34: #{exclusion_loss.4} parent=27 // pred_check_branch
        %597 = sbr.rel (%p595) target = $region36
      $region35: #{exclusion_loss.4} parent=27 // pred_region
        _
      $region36: #{exclusion_loss.4} parent=27 // pred_fallthru
        _
    $region28: #{exclusion_loss.4} parent=5 // pred_fallthru
      _
    %p598 = scmp.le.s32.totalorder 2, %s10
    // Predicated region
    $region37: #{exclusion_loss.4} parent=5 // pred_check
      %p599 = pneg %p598
    $region38: #{exclusion_loss.4} parent=5 // pred_check_branch
      %601 = sbr.rel (%p599) target = $region40
    $region39: #{exclusion_loss.4} parent=5 // pred_region
      %s602 = ssub.s32 %s10, 2
      // Predicated region
      $region41: #{exclusion_loss.4} parent=39 // pred_check
        %p603 = pneg %p91
      $region42: #{exclusion_loss.4} parent=39 // pred_check_branch
        %605 = sbr.rel (%p603) target = $region44
      $region43: #{exclusion_loss.4} parent=39 // pred_region
        %p606 = scmp.lt.s32.totalorder %s16, 1
        %s607 = scalar_select %p606, %s16, 1
        %s608 = smul.addr %s607, 4
        %s609 = scalar_lea.vmem %s2, %s608
      $region44: #{exclusion_loss.4} parent=39 // pred_fallthru
        _
      // Predicated region
      $region45: #{exclusion_loss.4} parent=39 // pred_check
        %p610 = pneg %p117
      $region46: #{exclusion_loss.4} parent=39 // pred_check_branch
        %612 = sbr.rel (%p610) target = $region48
      $region47: #{exclusion_loss.4} parent=39 // pred_region
        %p613 = scmp.lt.s32.totalorder %s16, 1
        %s614 = scalar_select %p613, %s16, 1
        %s615 = smul.addr %s614, 4
        %s616 = scalar_lea.vmem %s3, %s615
      $region48: #{exclusion_loss.4} parent=39 // pred_fallthru
        _
    $region40: #{exclusion_loss.4} parent=5 // pred_fallthru
      _
  $region6: #{exclusion_loss.4} parent=0 // loop_footer
    %s14 = sadd.s32 1, %s10
  $region7: #{exclusion_loss.4} parent=0 // loop_footer_branch
    %9 = sbr.rel target = $region3
  $region8: #{exclusion_loss.4} parent=0 // loop_exit
    _

// kernel: exclusion_loss.5
$region0: #{exclusion_loss.5}
  #allocation0 [shape = 'u32[]', space=smem, size = 0x4, offset = 0x4, fixed_abs, tag = 'smem constant byte address 0x4 - core index']
  #allocation1 [shape = 'u32[144,128]{1,0:T(1,128)}', space=vmem, size = 0x12000, scoped, tag = 'internal scratch']
  %s0 = inlined_call_operand.vmem [shape: f32[2,3,4,4], index: 0, kind: input, shape index: {}]
  %s1 = inlined_call_operand.vmem [shape: f32[2,3,4,4], index: 1, kind: input, shape index: {}]
  %s2 = inlined_call_operand.vmem [shape: f32[2,3,3], index: 2, kind: output, shape index: {0}]
  %s3 = inlined_call_operand.vmem [shape: f32[2,3,3], index: 3, kind: output, shape index: {1}]
  %4 = xla_tuple %s2, %s3
  %s5 = sld [smem:[#allocation0]]
  $region49: #{exclusion_loss.5} parent=0
    _
  %s7 = ssub.s32 1, %s5
  %s8 = scalar_select 0, %s7, %s5
  loop: start=0, step=1, limit=4
  $region2: #{exclusion_loss.5} parent=0 // loop_pre_header
    _
  $region3: #{exclusion_loss.5} parent=0 // loop_header
    %s10 = sphi 0, %s14
    %p11 = scmp.ge.s32.totalorder %s10, 4
    %s20 = sphi 0, %s22
    %s23 = sphi 0, %s20
    %s24 = sphi 0, %s23
    %s40 = sphi 0, %s24
    %s46 = sphi 0, %s48
    %s49 = sphi 0, %s46
    %s50 = sphi 0, %s49
    %s66 = sphi 0, %s50
    %s72 = sphi 0, %s74
    %s75 = sphi 0, %s72
    %s76 = sphi 0, %s75
    %s92 = sphi 0, %s76
    %s98 = sphi 0, %s100
    %s101 = sphi 0, %s98
    %s102 = sphi 0, %s101
    %s118 = sphi 0, %s102
  $region4: #{exclusion_loss.5} parent=0 // loop_header_branch
    %13 = sbr.rel (%p11) target = $region8
  $region5: #{exclusion_loss.5} parent=0 // loop_body
    %s15 = ssub.s32 %s10, 1
    %s16 = ssub.s32 %s10, 2
    %s17 = sadd.s32 %s10, 1
    %s18 = ssub.s32 %s10, %s17
    %p19 = scmp.eq.s32.totalorder %s18, 0
    %s21 = sadd.s32 %s20, 1
    %s22 = scalar_select %p19, %s20, %s21
    %p25 = pneg %p19
    %p26 = scmp.eq.s32.totalorder %s10, 1
    %p27 = por %p25, %p26
    %p28 = scmp.ne.s32.totalorder %s20, %s23
    %p29 = scmp.eq.s32.totalorder %s10, 0
    %p30 = por %p28, %p29
    %p31 = scmp.ne.s32.totalorder %s20, %s23
    %p32 = scmp.eq.s32.totalorder %s15, 1
    %p33 = por %p31, %p32
    %p34 = scmp.ne.s32.totalorder %s23, %s24
    %p35 = scmp.eq.s32.totalorder %s15, 0
    %p36 = por %p34, %p35
    %p37 = scmp.ne.s32.totalorder %s23, %s24
    %p38 = scmp.eq.s32.totalorder %s16, 1
    %p39 = por %p37, %p38
    %p41 = scmp.ne.s32.totalorder %s24, %s40
    %p42 = scmp.eq.s32.totalorder %s16, 0
    %p43 = por %p41, %p42
    %s44 = ssub.s32 %s10, %s17
    %p45 = scmp.eq.s32.totalorder %s44, 0
    %s47 = sadd.s32 %s46, 1
    %s48 = scalar_select %p45, %s46, %s47
    %p51 = pneg %p45
    %p52 = scmp.eq.s32.totalorder %s10, 1
    %p53 = por %p51, %p52
    %p54 = scmp.ne.s32.totalorder %s46, %s49
    %p55 = scmp.eq.s32.totalorder %s10, 0
    %p56 = por %p54, %p55
    %p57 = scmp.ne.s32.totalorder %s46, %s49
    %p58 = scmp.eq.s32.totalorder %s15, 1
    %p59 = por %p57, %p58
    %p60 = scmp.ne.s32.totalorder %s49, %s50
    %p61 = scmp.eq.s32.totalorder %s15, 0
    %p62 = por %p60, %p61
    %p63 = scmp.ne.s32.totalorder %s49, %s50
    %p64 = scmp.eq.s32.totalorder %s16, 1
    %p65 = por %p63, %p64
    %p67 = scmp.ne.s32.totalorder %s50, %s66
    %p68 = scmp.eq.s32.totalorder %s16, 0
    %p69 = por %p67, %p68
    %s70 = ssub.s32 %s10, %s17
    %p71 = scmp.eq.s32.totalorder %s70, 0
    %s73 = sadd.s32 %s72, 1
    %s74 = scalar_select %p71, %s72, %s73
    %p77 = pneg %p71
    %p78 = scmp.eq.s32.totalorder %s10, 1
    %p79 = por %p77, %p78
    %p80 = scmp.ne.s32.totalorder %s72, %s75
    %p81 = scmp.eq.s32.totalorder %s10, 0
    %p82 = por %p80, %p81
    %p83 = scmp.ne.s32.totalorder %s72, %s75
    %p84 = scmp.eq.s32.totalorder %s15, 1
    %p85 = por %p83, %p84
    %p86 = scmp.ne.s32.totalorder %s75, %s76
    %p87 = scmp.eq.s32.totalorder %s15, 0
    %p88 = por %p86, %p87
    %p89 = scmp.ne.s32.totalorder %s75, %s76
    %p90 = scmp.eq.s32.totalorder %s16, 1
    %p91 = por %p89, %p90
    %p93 = scmp.ne.s32.totalorder %s76, %s92
    %p94 = scmp.eq.s32.totalorder %s16, 0
    %p95 = por %p93, %p94
    %s96 = ssub.s32 %s10, %s17
    %p97 = scmp.eq.s32.totalorder %s96, 0
    %s99 = sadd.s32 %s98, 1
    %s100 = scalar_select %p97, %s98, %s99
    %p103 = pneg %p97
    %p104 = scmp.eq.s32.totalorder %s10, 1
    %p105 = por %p103, %p104
    %p106 = scmp.ne.s32.totalorder %s98, %s101
    %p107 = scmp.eq.s32.totalorder %s10, 0
    %p108 = por %p106, %p107
    %p109 = scmp.ne.s32.totalorder %s98, %s101
    %p110 = scmp.eq.s32.totalorder %s15, 1
    %p111 = por %p109, %p110
    %p112 = scmp.ne.s32.totalorder %s101, %s102
    %p113 = scmp.eq.s32.totalorder %s15, 0
    %p114 = por %p112, %p113
    %p115 = scmp.ne.s32.totalorder %s101, %s102
    %p116 = scmp.eq.s32.totalorder %s16, 1
    %p117 = por %p115, %p116
    %p119 = scmp.ne.s32.totalorder %s102, %s118
    %p120 = scmp.eq.s32.totalorder %s16, 0
    %p121 = por %p119, %p120
    %p122 = scmp.le.s32.totalorder 1, %s10
    %p123 = scmp.lt.s32.totalorder %s10, 3
    %p124 = pnand %p122, %p123
    %p125 = pneg %p124
    // Predicated region
    $region9: #{exclusion_loss.5} parent=5 // pred_check
      _
    $region10: #{exclusion_loss.5} parent=5 // pred_check_branch
      %127 = sbr.rel (%p124) target = $region12
    $region11: #{exclusion_loss.5} parent=5 // pred_region
      %s128 = ssub.s32 %s10, 1
    $region12: #{exclusion_loss.5} parent=5 // pred_fallthru
      _
    %p129 = scmp.lt.s32.totalorder %s10, 2
    // Predicated region
    $region13: #{exclusion_loss.5} parent=5 // pred_check
      %p130 = pneg %p129
    $region14: #{exclusion_loss.5} parent=5 // pred_check_branch
      %132 = sbr.rel (%p130) target = $region16
    $region15: #{exclusion_loss.5} parent=5 // pred_region
      // Predicated region
      $region17: #{exclusion_loss.5} parent=15 // pred_check
        %p133 = pneg %p30
      $region18: #{exclusion_loss.5} parent=15 // pred_check_branch
        %135 = sbr.rel (%p133) target = $region20
      $region19: #{exclusion_loss.5} parent=15 // pred_region
        %p136 = scmp.lt.s32.totalorder %s10, 1
        %s137 = scalar_select %p136, %s10, 1
        %s138 = smul.addr %s137, 3
        %s139 = smul.addr %s138, 4
        %s140 = scalar_lea.vmem %s0, %s139
      $region20: #{exclusion_loss.5} parent=15 // pred_fallthru
        _
      // Predicated region
      $region21: #{exclusion_loss.5} parent=15 // pred_check
        %p141 = pneg %p56
      $region22: #{exclusion_loss.5} parent=15 // pred_check_branch
        %143 = sbr.rel (%p141) target = $region24
      $region23: #{exclusion_loss.5} parent=15 // pred_region
        %p144 = scmp.lt.s32.totalorder %s10, 1
        %s145 = scalar_select %p144, %s10, 1
        %s146 = smul.addr %s145, 3
        %s147 = smul.addr %s146, 4
        %s148 = scalar_lea.vmem %s1, %s147
      $region24: #{exclusion_loss.5} parent=15 // pred_fallthru
        _
    $region16: #{exclusion_loss.5} parent=5 // pred_fallthru
      _
    %p149 = scmp.le.s32.totalorder 1, %s10
    %p150 = scmp.lt.s32.totalorder %s10, 3
    %p151 = pnand %p149, %p150
    %p152 = pneg %p151
    // Predicated region
    $region25: #{exclusion_loss.5} parent=5 // pred_check
      _
    $region26: #{exclusion_loss.5} parent=5 // pred_check_branch
      %154 = sbr.rel (%p151) target = $region28
    $region27: #{exclusion_loss.5} parent=5 // pred_region
      %s155 = ssub.s32 %s10, 1
      %p156 = scmp.lt.s32.totalorder %s15, 1
      %s157 = scalar_select %p156, %s15, 1
      %s158 = smul.addr %s157, 3
      %s159 = smul.addr %s158, 4
      %s160 = scalar_lea.vmem %s0, %s159
      %p161 = pneg %p36
      %p162 = pneg %p33
      %p163 = scmp.lt.s32.totalorder %s15, 1
      %s164 = scalar_select %p163, %s15, 1
      %s165 = smul.addr %s164, 3
      %s166 = smul.addr %s165, 4
      %s167 = scalar_lea.vmem %s1, %s166
      %p168 = pneg %p62
      %p169 = pneg %p59
      %p170 = pneg %p88
      %p171 = pneg %p85
      %p172 = scmp.lt.s32.totalorder %s15, 1
      %s173 = scalar_select %p172, %s15, 1
      %s174 = smul.addr %s173, 4
      %s175 = scalar_lea.vmem %s2, %s174
      %p176 = pneg %p114
      %p177 = pneg %p111
      %p178 = scmp.lt.s32.totalorder %s15, 1
      %s179 = scalar_select %p178, %s15, 1
      %s180 = smul.addr %s179, 4
      %s181 = scalar_lea.vmem %s3, %s180
      %p182 = scmp.lt.s32.totalorder %s15, 1
      %s183 = scalar_select %p182, %s15, 1
      %s184 = smul.addr %s183, 3
      %s185 = smul.addr %s184, 4
      %s186 = scalar_lea.vmem %s0, %s185
      %p187 = scmp.lt.s32.totalorder %s15, 1
      %s188 = scalar_select %p187, %s15, 1
      %s189 = smul.addr %s188, 3
      %s190 = smul.addr %s189, 4
      %s191 = scalar_lea.vmem %s1, %s190
      %p192 = scmp.lt.s32.totalorder %s15, 1
      %s193 = scalar_select %p192, %s15, 1
      %s194 = smul.addr %s193, 4
      %s195 = scalar_lea.vmem %s2, %s194
      %p196 = scmp.lt.s32.totalorder %s15, 1
      %s197 = scalar_select %p196, %s15, 1
      %s198 = smul.addr %s197, 4
      %s199 = scalar_lea.vmem %s3, %s198
      %v200 = vld [vmem:[%s186] sm:$0xf]
      %v201 = vld [vmem:[%s186 + $0x4] sm:$0xf]
      %v202 = vld [vmem:[%s186 + $0x8] sm:$0xf]
      %v203 = vld [vmem:[%s191] sm:$0xf]
      %v204 = vld [vmem:[%s191 + $0x4] sm:$0xf]
      %v205 = vld [vmem:[%s191 + $0x8] sm:$0xf]
      %v209 = vrot.slane %v200, 7
      %v210 = vrot.slane %v201, 7
      %v211 = vrot.slane %v202, 7
      %v215 = vsub.f32 %v200, %v209
      %v216 = vsub.f32 %v201, %v210
      %v217 = vsub.f32 %v202, %v211
      %v218 = vadd.f32 %v215, 1e-06
      %v219 = vadd.f32 %v216, 1e-06
      %v220 = vadd.f32 %v217, 1e-06
      %221 = vrot.lane.b32.xlu0 %v200, 1
      %v222 = vpop.permute.xlu0 %221
      %223 = vrot.lane.b32.xlu0 %v201, 1
      %v224 = vpop.permute.xlu0 %223
      %225 = vrot.lane.b32.xlu0 %v202, 1
      %v226 = vpop.permute.xlu0 %225
      %v230 = vsub.f32 %v200, %v222
      %v231 = vsub.f32 %v201, %v224
      %v232 = vsub.f32 %v202, %v226
      %v233 = vadd.f32 %v230, 1e-06
      %v234 = vadd.f32 %v231, 1e-06
      %v235 = vadd.f32 %v232, 1e-06
      %v239 = vrot.slane %v203, 7
      %v240 = vrot.slane %v204, 7
      %v241 = vrot.slane %v205, 7
      %v245 = vsub.f32 %v203, %v239
      %v246 = vsub.f32 %v204, %v240
      %v247 = vsub.f32 %v205, %v241
      %v248 = vadd.f32 %v245, 1e-06
      %v249 = vadd.f32 %v246, 1e-06
      %v250 = vadd.f32 %v247, 1e-06
      %251 = vrot.lane.b32.xlu0 %v203, 1
      %v252 = vpop.permute.xlu0 %251
      %253 = vrot.lane.b32.xlu0 %v204, 1
      %v254 = vpop.permute.xlu0 %253
      %255 = vrot.lane.b32.xlu0 %v205, 1
      %v256 = vpop.permute.xlu0 %255
      %v260 = vsub.f32 %v203, %v252
      %v261 = vsub.f32 %v204, %v254
      %v262 = vsub.f32 %v205, %v256
      %v263 = vadd.f32 %v260, 1e-06
      %v264 = vadd.f32 %v261, 1e-06
      %v265 = vadd.f32 %v262, 1e-06
      %v266 = vmul.f32 %v218, 0.5
      %v267 = vmul.f32 %v219, 0.5
      %v268 = vmul.f32 %v220, 0.5
      %v269 = vtanh.pop %v266
      %v270 = vtanh.pop %v267
      %v271 = vtanh.pop %v268
      %v272 = vmul.f32 %v269, %v269
      %v273 = vmul.f32 %v270, %v270
      %v274 = vmul.f32 %v271, %v271
      %v275 = vmul.f32 %v248, 0.5
      %v276 = vmul.f32 %v249, 0.5
      %v277 = vmul.f32 %v250, 0.5
      %v278 = vtanh.pop %v275
      %v279 = vtanh.pop %v276
      %v280 = vtanh.pop %v277
      %v281 = vmul.f32 %v278, %v278
      %v282 = vmul.f32 %v279, %v279
      %v283 = vmul.f32 %v280, %v280
      %v284 = vmul.f32 %v233, 0.5
      %v285 = vmul.f32 %v234, 0.5
      %v286 = vmul.f32 %v235, 0.5
      %v287 = vtanh.pop %v284
      %v288 = vtanh.pop %v285
      %v289 = vtanh.pop %v286
      %v290 = vmul.f32 %v287, %v287
      %v291 = vmul.f32 %v288, %v288
      %v292 = vmul.f32 %v289, %v289
      %v293 = vmul.f32 %v263, 0.5
      %v294 = vmul.f32 %v264, 0.5
      %v295 = vmul.f32 %v265, 0.5
      %v296 = vtanh.pop %v293
      %v297 = vtanh.pop %v294
      %v298 = vtanh.pop %v295
      %v299 = vmul.f32 %v296, %v296
      %v300 = vmul.f32 %v297, %v297
      %v301 = vmul.f32 %v298, %v298
      %v302 = vmul.f32 %v272, %v281
      %v303 = vmul.f32 %v272, %v282
      %v304 = vmul.f32 %v272, %v283
      %v305 = vmul.f32 %v273, %v281
      %v306 = vmul.f32 %v273, %v282
      %v307 = vmul.f32 %v273, %v283
      %v308 = vmul.f32 %v274, %v281
      %v309 = vmul.f32 %v274, %v282
      %v310 = vmul.f32 %v274, %v283
      %vm311 = vcmask 27649
      %v312 = vsel %vm311, %v302, 0.0
      %313 = vadd.xlane.f32.xlu0 %v312
      %v314 = vpop.xlane.xlu0 %313
      %v315 = vsel %vm311, %v303, 0.0
      %316 = vadd.xlane.f32.xlu0 %v315
      %v317 = vpop.xlane.xlu0 %316
      %v318 = vsel %vm311, %v304, 0.0
      %319 = vadd.xlane.f32.xlu0 %v318
      %v320 = vpop.xlane.xlu0 %319
      %v321 = vsel %vm311, %v305, 0.0
      %322 = vadd.xlane.f32.xlu0 %v321
      %v323 = vpop.xlane.xlu0 %322
      %v324 = vsel %vm311, %v306, 0.0
      %325 = vadd.xlane.f32.xlu0 %v324
      %v326 = vpop.xlane.xlu0 %325
      %v327 = vsel %vm311, %v307, 0.0
      %328 = vadd.xlane.f32.xlu0 %v327
      %v329 = vpop.xlane.xlu0 %328
      %v330 = vsel %vm311, %v308, 0.0
      %331 = vadd.xlane.f32.xlu0 %v330
      %v332 = vpop.xlane.xlu0 %331
      %v333 = vsel %vm311, %v309, 0.0
      %334 = vadd.xlane.f32.xlu0 %v333
      %v335 = vpop.xlane.xlu0 %334
      %v336 = vsel %vm311, %v310, 0.0
      %337 = vadd.xlane.f32.xlu0 %v336
      %v338 = vpop.xlane.xlu0 %337
      %v348 = vlaneseq
      %v349 = vand.u32 %v348, 127
      %v350 = vadd.s32 %v349, 1
      %v351 = vlaneseq
      %v352 = vshrl.u32 %v351, 7
      %v353 = vsub.s32 %v350, %v352
      %v354 = vrot.slane %v314, %v353
      %v355 = vlaneseq
      %v356 = vshrl.u32 %v355, 7
      %v357 = vsub.s32 %v350, %v356
      %v358 = vrot.slane %v317, %v357
      %v359 = vlaneseq
      %v360 = vshrl.u32 %v359, 7
      %v361 = vsub.s32 %v350, %v360
      %v362 = vrot.slane %v320, %v361
      %v363 = vlaneseq
      %v364 = vshrl.u32 %v363, 7
      %v365 = vsub.s32 %v350, %v364
      %v366 = vrot.slane %v323, %v365
      %v367 = vlaneseq
      %v368 = vshrl.u32 %v367, 7
      %v369 = vsub.s32 %v350, %v368
      %v370 = vrot.slane %v326, %v369
      %v371 = vlaneseq
      %v372 = vshrl.u32 %v371, 7
      %v373 = vsub.s32 %v350, %v372
      %v374 = vrot.slane %v329, %v373
      %v375 = vlaneseq
      %v376 = vshrl.u32 %v375, 7
      %v377 = vsub.s32 %v350, %v376
      %v378 = vrot.slane %v332, %v377
      %v379 = vlaneseq
      %v380 = vshrl.u32 %v379, 7
      %v381 = vsub.s32 %v350, %v380
      %v382 = vrot.slane %v335, %v381
      %v383 = vlaneseq
      %v384 = vshrl.u32 %v383, 7
      %v385 = vsub.s32 %v350, %v384
      %v386 = vrot.slane %v338, %v385
      %vm387 = vcmask 1041409
      %v388 = vsel %vm387, %v358, %v354
      %vm389 = vcmask 1042434
      %v390 = vsel %vm389, %v362, %v388
      %v391 = vsel %vm387, %v370, %v366
      %v392 = vsel %vm389, %v374, %v391
      %v393 = vsel %vm387, %v382, %v378
      %v394 = vsel %vm389, %v386, %v393
      %vm398 = vcmask 18432
      %v399 = vsel %vm398, %v390, 0.0
      %400 = vadd.xlane.f32.xlu0 %v399
      %v401 = vpop.xlane.xlu0 %400
      %v402 = vsel %vm398, %v392, 0.0
      %403 = vadd.xlane.f32.xlu0 %v402
      %v404 = vpop.xlane.xlu0 %403
      %v405 = vsel %vm398, %v394, 0.0
      %406 = vadd.xlane.f32.xlu0 %v405
      %v407 = vpop.xlane.xlu0 %406
      %v411 = vlaneseq
      %v412 = vshrl.u32 %v411, 7
      %v413 = vsub.s32 %v349, %v412
      %v414 = vrot.slane %v401, %v413
      %v415 = vlaneseq
      %v416 = vshrl.u32 %v415, 7
      %v417 = vsub.s32 %v349, %v416
      %v418 = vrot.slane %v404, %v417
      %v419 = vlaneseq
      %v420 = vshrl.u32 %v419, 7
      %v421 = vsub.s32 %v349, %v420
      %v422 = vrot.slane %v407, %v421
      %v423 = vsel %vm387, %v418, %v414
      %v424 = vsel %vm389, %v422, %v423
      %426 = vst.msk [vmem:[%s195] sm:$0x7] %vm398, %v424
      %v427 = vmul.f32 %v290, %v299
      %v428 = vmul.f32 %v290, %v300
      %v429 = vmul.f32 %v290, %v301
      %v430 = vmul.f32 %v291, %v299
      %v431 = vmul.f32 %v291, %v300
      %v432 = vmul.f32 %v291, %v301
      %v433 = vmul.f32 %v292, %v299
      %v434 = vmul.f32 %v292, %v300
      %v435 = vmul.f32 %v292, %v301
      %445 = vrot.lane.b32.xlu0 %v427, 127
      %v446 = vpop.permute.xlu0 %445
      %447 = vrot.lane.b32.xlu0 %v428, 127
      %v448 = vpop.permute.xlu0 %447
      %449 = vrot.lane.b32.xlu0 %v429, 127
      %v450 = vpop.permute.xlu0 %449
      %451 = vrot.lane.b32.xlu0 %v430, 127
      %v452 = vpop.permute.xlu0 %451
      %453 = vrot.lane.b32.xlu0 %v431, 127
      %v454 = vpop.permute.xlu0 %453
      %455 = vrot.lane.b32.xlu0 %v432, 127
      %v456 = vpop.permute.xlu0 %455
      %457 = vrot.lane.b32.xlu0 %v433, 127
      %v458 = vpop.permute.xlu0 %457
      %459 = vrot.lane.b32.xlu0 %v434, 127
      %v460 = vpop.permute.xlu0 %459
      %461 = vrot.lane.b32.xlu0 %v435, 127
      %v462 = vpop.permute.xlu0 %461
      %vm472 = vcmask 19456
      %v473 = vsel %vm472, %v446, 0.0
      %474 = vadd.xlane.f32.xlu0 %v473
      %v475 = vpop.xlane.xlu0 %474
      %v476 = vsel %vm472, %v448, 0.0
      %477 = vadd.xlane.f32.xlu0 %v476
      %v478 = vpop.xlane.xlu0 %477
      %v479 = vsel %vm472, %v450, 0.0
      %480 = vadd.xlane.f32.xlu0 %v479
      %v481 = vpop.xlane.xlu0 %480
      %v482 = vsel %vm472, %v452, 0.0
      %483 = vadd.xlane.f32.xlu0 %v482
      %v484 = vpop.xlane.xlu0 %483
      %v485 = vsel %vm472, %v454, 0.0
      %486 = vadd.xlane.f32.xlu0 %v485
      %v487 = vpop.xlane.xlu0 %486
      %v488 = vsel %vm472, %v456, 0.0
      %489 = vadd.xlane.f32.xlu0 %v488
      %v490 = vpop.xlane.xlu0 %489
      %v491 = vsel %vm472, %v458, 0.0
      %492 = vadd.xlane.f32.xlu0 %v491
      %v493 = vpop.xlane.xlu0 %492
      %v494 = vsel %vm472, %v460, 0.0
      %495 = vadd.xlane.f32.xlu0 %v494
      %v496 = vpop.xlane.xlu0 %495
      %v497 = vsel %vm472, %v462, 0.0
      %498 = vadd.xlane.f32.xlu0 %v497
      %v499 = vpop.xlane.xlu0 %498
      %v509 = vlaneseq
      %v510 = vshrl.u32 %v509, 7
      %v511 = vsub.s32 %v349, %v510
      %v512 = vrot.slane %v475, %v511
      %v513 = vlaneseq
      %v514 = vshrl.u32 %v513, 7
      %v515 = vsub.s32 %v349, %v514
      %v516 = vrot.slane %v478, %v515
      %v517 = vlaneseq
      %v518 = vshrl.u32 %v517, 7
      %v519 = vsub.s32 %v349, %v518
      %v520 = vrot.slane %v481, %v519
      %v521 = vlaneseq
      %v522 = vshrl.u32 %v521, 7
      %v523 = vsub.s32 %v349, %v522
      %v524 = vrot.slane %v484, %v523
      %v525 = vlaneseq
      %v526 = vshrl.u32 %v525, 7
      %v527 = vsub.s32 %v349, %v526
      %v528 = vrot.slane %v487, %v527
      %v529 = vlaneseq
      %v530 = vshrl.u32 %v529, 7
      %v531 = vsub.s32 %v349, %v530
      %v532 = vrot.slane %v490, %v531
      %v533 = vlaneseq
      %v534 = vshrl.u32 %v533, 7
      %v535 = vsub.s32 %v349, %v534
      %v536 = vrot.slane %v493, %v535
      %v537 = vlaneseq
      %v538 = vshrl.u32 %v537, 7
      %v539 = vsub.s32 %v349, %v538
      %v540 = vrot.slane %v496, %v539
      %v541 = vlaneseq
      %v542 = vshrl.u32 %v541, 7
      %v543 = vsub.s32 %v349, %v542
      %v544 = vrot.slane %v499, %v543
      %v545 = vsel %vm387, %v516, %v512
      %v546 = vsel %vm389, %v520, %v545
      %v547 = vsel %vm387, %v528, %v524
      %v548 = vsel %vm389, %v532, %v547
      %v549 = vsel %vm387, %v540, %v536
      %v550 = vsel %vm389, %v544, %v549
      %vm554 = vcmask 26624
      %v555 = vsel %vm554, %v546, 0.0
      %556 = vadd.xlane.f32.xlu0 %v555
      %v557 = vpop.xlane.xlu0 %556
      %v558 = vsel %vm554, %v548, 0.0
      %559 = vadd.xlane.f32.xlu0 %v558
      %v560 = vpop.xlane.xlu0 %559
      %v561 = vsel %vm554, %v550, 0.0
      %562 = vadd.xlane.f32.xlu0 %v561
      %v563 = vpop.xlane.xlu0 %562
      %v567 = vlaneseq
      %v568 = vshrl.u32 %v567, 7
      %v569 = vsub.s32 %v349, %v568
      %v570 = vrot.slane %v557, %v569
      %v571 = vlaneseq
      %v572 = vshrl.u32 %v571, 7
      %v573 = vsub.s32 %v349, %v572
      %v574 = vrot.slane %v560, %v573
      %v575 = vlaneseq
      %v576 = vshrl.u32 %v575, 7
      %v577 = vsub.s32 %v349, %v576
      %v578 = vrot.slane %v563, %v577
      %v579 = vsel %vm387, %v574, %v570
      %v580 = vsel %vm389, %v578, %v579
      %582 = vst.msk [vmem:[%s199] sm:$0x7] %vm398, %v580
      %p583 = scmp.lt.s32.totalorder %s15, 1
      %s584 = scalar_select %p583, %s15, 1
      %s585 = smul.addr %s584, 4
      %s586 = scalar_lea.vmem %s2, %s585
      %p587 = scmp.lt.s32.totalorder %s15, 1
      %s588 = scalar_select %p587, %s15, 1
      %s589 = smul.addr %s588, 4
      %s590 = scalar_lea.vmem %s3, %s589
      // Predicated region
      $region29: #{exclusion_loss.5} parent=27 // pred_check
        %p591 = pneg %p85
      $region30: #{exclusion_loss.5} parent=27 // pred_check_branch
        %593 = sbr.rel (%p591) target = $region32
      $region31: #{exclusion_loss.5} parent=27 // pred_region
        _
      $region32: #{exclusion_loss.5} parent=27 // pred_fallthru
        _
      // Predicated region
      $region33: #{exclusion_loss.5} parent=27 // pred_check
        %p594 = pneg %p111
      $region34: #{exclusion_loss.5} parent=27 // pred_check_branch
        %596 = sbr.rel (%p594) target = $region36
      $region35: #{exclusion_loss.5} parent=27 // pred_region
        _
      $region36: #{exclusion_loss.5} parent=27 // pred_fallthru
        _
    $region28: #{exclusion_loss.5} parent=5 // pred_fallthru
      _
    %p597 = scmp.le.s32.totalorder 2, %s10
    // Predicated region
    $region37: #{exclusion_loss.5} parent=5 // pred_check
      %p598 = pneg %p597
    $region38: #{exclusion_loss.5} parent=5 // pred_check_branch
      %600 = sbr.rel (%p598) target = $region40
    $region39: #{exclusion_loss.5} parent=5 // pred_region
      %s601 = ssub.s32 %s10, 2
      // Predicated region
      $region41: #{exclusion_loss.5} parent=39 // pred_check
        %p602 = pneg %p91
      $region42: #{exclusion_loss.5} parent=39 // pred_check_branch
        %604 = sbr.rel (%p602) target = $region44
      $region43: #{exclusion_loss.5} parent=39 // pred_region
        %p605 = scmp.lt.s32.totalorder %s16, 1
        %s606 = scalar_select %p605, %s16, 1
        %s607 = smul.addr %s606, 4
        %s608 = scalar_lea.vmem %s2, %s607
      $region44: #{exclusion_loss.5} parent=39 // pred_fallthru
        _
      // Predicated region
      $region45: #{exclusion_loss.5} parent=39 // pred_check
        %p609 = pneg %p117
      $region46: #{exclusion_loss.5} parent=39 // pred_check_branch
        %611 = sbr.rel (%p609) target = $region48
      $region47: #{exclusion_loss.5} parent=39 // pred_region
        %p612 = scmp.lt.s32.totalorder %s16, 1
        %s613 = scalar_select %p612, %s16, 1
        %s614 = smul.addr %s613, 4
        %s615 = scalar_lea.vmem %s3, %s614
      $region48: #{exclusion_loss.5} parent=39 // pred_fallthru
        _
    $region40: #{exclusion_loss.5} parent=5 // pred_fallthru
      _
  $region6: #{exclusion_loss.5} parent=0 // loop_footer
    %s14 = sadd.s32 1, %s10
  $region7: #{exclusion_loss.5} parent=0 // loop_footer_branch
    %9 = sbr.rel target = $region3
  $region8: #{exclusion_loss.5} parent=0 // loop_exit
    _

// kernel: exclusion_loss.3
$region0: #{exclusion_loss.3}
  #allocation0 [shape = 'u32[]', space=smem, size = 0x4, offset = 0x4, fixed_abs, tag = 'smem constant byte address 0x4 - core index']
  #allocation1 [shape = 'u32[144,128]{1,0:T(1,128)}', space=vmem, size = 0x12000, scoped, tag = 'internal scratch']
  %s0 = inlined_call_operand.vmem [shape: f32[2,3,16,16], index: 0, kind: input, shape index: {}]
  %s1 = inlined_call_operand.vmem [shape: f32[2,3,16,16], index: 1, kind: input, shape index: {}]
  %s2 = inlined_call_operand.vmem [shape: f32[2,3,3], index: 2, kind: output, shape index: {0}]
  %s3 = inlined_call_operand.vmem [shape: f32[2,3,3], index: 3, kind: output, shape index: {1}]
  %4 = xla_tuple %s2, %s3
  %s5 = sld [smem:[#allocation0]]
  $region49: #{exclusion_loss.3} parent=0
    _
  %s7 = ssub.s32 1, %s5
  %s8 = scalar_select 0, %s7, %s5
  loop: start=0, step=1, limit=4
  $region2: #{exclusion_loss.3} parent=0 // loop_pre_header
    _
  $region3: #{exclusion_loss.3} parent=0 // loop_header
    %s10 = sphi 0, %s14
    %p11 = scmp.ge.s32.totalorder %s10, 4
    %s20 = sphi 0, %s22
    %s23 = sphi 0, %s20
    %s24 = sphi 0, %s23
    %s40 = sphi 0, %s24
    %s46 = sphi 0, %s48
    %s49 = sphi 0, %s46
    %s50 = sphi 0, %s49
    %s66 = sphi 0, %s50
    %s72 = sphi 0, %s74
    %s75 = sphi 0, %s72
    %s76 = sphi 0, %s75
    %s92 = sphi 0, %s76
    %s98 = sphi 0, %s100
    %s101 = sphi 0, %s98
    %s102 = sphi 0, %s101
    %s118 = sphi 0, %s102
  $region4: #{exclusion_loss.3} parent=0 // loop_header_branch
    %13 = sbr.rel (%p11) target = $region8
  $region5: #{exclusion_loss.3} parent=0 // loop_body
    %s15 = ssub.s32 %s10, 1
    %s16 = ssub.s32 %s10, 2
    %s17 = sadd.s32 %s10, 1
    %s18 = ssub.s32 %s10, %s17
    %p19 = scmp.eq.s32.totalorder %s18, 0
    %s21 = sadd.s32 %s20, 1
    %s22 = scalar_select %p19, %s20, %s21
    %p25 = pneg %p19
    %p26 = scmp.eq.s32.totalorder %s10, 1
    %p27 = por %p25, %p26
    %p28 = scmp.ne.s32.totalorder %s20, %s23
    %p29 = scmp.eq.s32.totalorder %s10, 0
    %p30 = por %p28, %p29
    %p31 = scmp.ne.s32.totalorder %s20, %s23
    %p32 = scmp.eq.s32.totalorder %s15, 1
    %p33 = por %p31, %p32
    %p34 = scmp.ne.s32.totalorder %s23, %s24
    %p35 = scmp.eq.s32.totalorder %s15, 0
    %p36 = por %p34, %p35
    %p37 = scmp.ne.s32.totalorder %s23, %s24
    %p38 = scmp.eq.s32.totalorder %s16, 1
    %p39 = por %p37, %p38
    %p41 = scmp.ne.s32.totalorder %s24, %s40
    %p42 = scmp.eq.s32.totalorder %s16, 0
    %p43 = por %p41, %p42
    %s44 = ssub.s32 %s10, %s17
    %p45 = scmp.eq.s32.totalorder %s44, 0
    %s47 = sadd.s32 %s46, 1
    %s48 = scalar_select %p45, %s46, %s47
    %p51 = pneg %p45
    %p52 = scmp.eq.s32.totalorder %s10, 1
    %p53 = por %p51, %p52
    %p54 = scmp.ne.s32.totalorder %s46, %s49
    %p55 = scmp.eq.s32.totalorder %s10, 0
    %p56 = por %p54, %p55
    %p57 = scmp.ne.s32.totalorder %s46, %s49
    %p58 = scmp.eq.s32.totalorder %s15, 1
    %p59 = por %p57, %p58
    %p60 = scmp.ne.s32.totalorder %s49, %s50
    %p61 = scmp.eq.s32.totalorder %s15, 0
    %p62 = por %p60, %p61
    %p63 = scmp.ne.s32.totalorder %s49, %s50
    %p64 = scmp.eq.s32.totalorder %s16, 1
    %p65 = por %p63, %p64
    %p67 = scmp.ne.s32.totalorder %s50, %s66
    %p68 = scmp.eq.s32.totalorder %s16, 0
    %p69 = por %p67, %p68
    %s70 = ssub.s32 %s10, %s17
    %p71 = scmp.eq.s32.totalorder %s70, 0
    %s73 = sadd.s32 %s72, 1
    %s74 = scalar_select %p71, %s72, %s73
    %p77 = pneg %p71
    %p78 = scmp.eq.s32.totalorder %s10, 1
    %p79 = por %p77, %p78
    %p80 = scmp.ne.s32.totalorder %s72, %s75
    %p81 = scmp.eq.s32.totalorder %s10, 0
    %p82 = por %p80, %p81
    %p83 = scmp.ne.s32.totalorder %s72, %s75
    %p84 = scmp.eq.s32.totalorder %s15, 1
    %p85 = por %p83, %p84
    %p86 = scmp.ne.s32.totalorder %s75, %s76
    %p87 = scmp.eq.s32.totalorder %s15, 0
    %p88 = por %p86, %p87
    %p89 = scmp.ne.s32.totalorder %s75, %s76
    %p90 = scmp.eq.s32.totalorder %s16, 1
    %p91 = por %p89, %p90
    %p93 = scmp.ne.s32.totalorder %s76, %s92
    %p94 = scmp.eq.s32.totalorder %s16, 0
    %p95 = por %p93, %p94
    %s96 = ssub.s32 %s10, %s17
    %p97 = scmp.eq.s32.totalorder %s96, 0
    %s99 = sadd.s32 %s98, 1
    %s100 = scalar_select %p97, %s98, %s99
    %p103 = pneg %p97
    %p104 = scmp.eq.s32.totalorder %s10, 1
    %p105 = por %p103, %p104
    %p106 = scmp.ne.s32.totalorder %s98, %s101
    %p107 = scmp.eq.s32.totalorder %s10, 0
    %p108 = por %p106, %p107
    %p109 = scmp.ne.s32.totalorder %s98, %s101
    %p110 = scmp.eq.s32.totalorder %s15, 1
    %p111 = por %p109, %p110
    %p112 = scmp.ne.s32.totalorder %s101, %s102
    %p113 = scmp.eq.s32.totalorder %s15, 0
    %p114 = por %p112, %p113
    %p115 = scmp.ne.s32.totalorder %s101, %s102
    %p116 = scmp.eq.s32.totalorder %s16, 1
    %p117 = por %p115, %p116
    %p119 = scmp.ne.s32.totalorder %s102, %s118
    %p120 = scmp.eq.s32.totalorder %s16, 0
    %p121 = por %p119, %p120
    %p122 = scmp.le.s32.totalorder 1, %s10
    %p123 = scmp.lt.s32.totalorder %s10, 3
    %p124 = pnand %p122, %p123
    %p125 = pneg %p124
    // Predicated region
    $region9: #{exclusion_loss.3} parent=5 // pred_check
      _
    $region10: #{exclusion_loss.3} parent=5 // pred_check_branch
      %127 = sbr.rel (%p124) target = $region12
    $region11: #{exclusion_loss.3} parent=5 // pred_region
      %s128 = ssub.s32 %s10, 1
    $region12: #{exclusion_loss.3} parent=5 // pred_fallthru
      _
    %p129 = scmp.lt.s32.totalorder %s10, 2
    // Predicated region
    $region13: #{exclusion_loss.3} parent=5 // pred_check
      %p130 = pneg %p129
    $region14: #{exclusion_loss.3} parent=5 // pred_check_branch
      %132 = sbr.rel (%p130) target = $region16
    $region15: #{exclusion_loss.3} parent=5 // pred_region
      // Predicated region
      $region17: #{exclusion_loss.3} parent=15 // pred_check
        %p133 = pneg %p30
      $region18: #{exclusion_loss.3} parent=15 // pred_check_branch
        %135 = sbr.rel (%p133) target = $region20
      $region19: #{exclusion_loss.3} parent=15 // pred_region
        %p136 = scmp.lt.s32.totalorder %s10, 1
        %s137 = scalar_select %p136, %s10, 1
        %s138 = smul.addr %s137, 6
        %s139 = smul.addr %s138, 8
        %s140 = scalar_lea.vmem %s0, %s139
      $region20: #{exclusion_loss.3} parent=15 // pred_fallthru
        _
      // Predicated region
      $region21: #{exclusion_loss.3} parent=15 // pred_check
        %p141 = pneg %p56
      $region22: #{exclusion_loss.3} parent=15 // pred_check_branch
        %143 = sbr.rel (%p141) target = $region24
      $region23: #{exclusion_loss.3} parent=15 // pred_region
        %p144 = scmp.lt.s32.totalorder %s10, 1
        %s145 = scalar_select %p144, %s10, 1
        %s146 = smul.addr %s145, 6
        %s147 = smul.addr %s146, 8
        %s148 = scalar_lea.vmem %s1, %s147
      $region24: #{exclusion_loss.3} parent=15 // pred_fallthru
        _
    $region16: #{exclusion_loss.3} parent=5 // pred_fallthru
      _
    %p149 = scmp.le.s32.totalorder 1, %s10
    %p150 = scmp.lt.s32.totalorder %s10, 3
    %p151 = pnand %p149, %p150
    %p152 = pneg %p151
    // Predicated region
    $region25: #{exclusion_loss.3} parent=5 // pred_check
      _
    $region26: #{exclusion_loss.3} parent=5 // pred_check_branch
      %154 = sbr.rel (%p151) target = $region28
    $region27: #{exclusion_loss.3} parent=5 // pred_region
      %s155 = ssub.s32 %s10, 1
      %p156 = scmp.lt.s32.totalorder %s15, 1
      %s157 = scalar_select %p156, %s15, 1
      %s158 = smul.addr %s157, 6
      %s159 = smul.addr %s158, 8
      %s160 = scalar_lea.vmem %s0, %s159
      %p161 = pneg %p36
      %p162 = pneg %p33
      %p163 = scmp.lt.s32.totalorder %s15, 1
      %s164 = scalar_select %p163, %s15, 1
      %s165 = smul.addr %s164, 6
      %s166 = smul.addr %s165, 8
      %s167 = scalar_lea.vmem %s1, %s166
      %p168 = pneg %p62
      %p169 = pneg %p59
      %p170 = pneg %p88
      %p171 = pneg %p85
      %p172 = scmp.lt.s32.totalorder %s15, 1
      %s173 = scalar_select %p172, %s15, 1
      %s174 = smul.addr %s173, 4
      %s175 = scalar_lea.vmem %s2, %s174
      %p176 = pneg %p114
      %p177 = pneg %p111
      %p178 = scmp.lt.s32.totalorder %s15, 1
      %s179 = scalar_select %p178, %s15, 1
      %s180 = smul.addr %s179, 4
      %s181 = scalar_lea.vmem %s3, %s180
      %p182 = scmp.lt.s32.totalorder %s15, 1
      %s183 = scalar_select %p182, %s15, 1
      %s184 = smul.addr %s183, 6
      %s185 = smul.addr %s184, 8
      %s186 = scalar_lea.vmem %s0, %s185
      %p187 = scmp.lt.s32.totalorder %s15, 1
      %s188 = scalar_select %p187, %s15, 1
      %s189 = smul.addr %s188, 6
      %s190 = smul.addr %s189, 8
      %s191 = scalar_lea.vmem %s1, %s190
      %p192 = scmp.lt.s32.totalorder %s15, 1
      %s193 = scalar_select %p192, %s15, 1
      %s194 = smul.addr %s193, 4
      %s195 = scalar_lea.vmem %s2, %s194
      %p196 = scmp.lt.s32.totalorder %s15, 1
      %s197 = scalar_select %p196, %s15, 1
      %s198 = smul.addr %s197, 4
      %s199 = scalar_lea.vmem %s3, %s198
      %v200 = vld [vmem:[%s186] sm:$0xff]
      %v201 = vld [vmem:[%s186 + $0x8] sm:$0xff]
      %v202 = vld [vmem:[%s186 + $0x10] sm:$0xff]
      %v203 = vld [vmem:[%s186 + $0x18] sm:$0xff]
      %v204 = vld [vmem:[%s186 + $0x20] sm:$0xff]
      %v205 = vld [vmem:[%s186 + $0x28] sm:$0xff]
      %v206 = vld [vmem:[%s191] sm:$0xff]
      %v207 = vld [vmem:[%s191 + $0x8] sm:$0xff]
      %v208 = vld [vmem:[%s191 + $0x10] sm:$0xff]
      %v209 = vld [vmem:[%s191 + $0x18] sm:$0xff]
      %v210 = vld [vmem:[%s191 + $0x20] sm:$0xff]
      %v211 = vld [vmem:[%s191 + $0x28] sm:$0xff]
      %vm218 = vcmask 1040384
      %v219 = vrot.slane %v200, 7
      %v220 = vrot.slane %v201, 7
      %v221 = vsel %vm218, %v219, %v220
      %v222 = vrot.slane %v202, 7
      %v223 = vrot.slane %v203, 7
      %v224 = vsel %vm218, %v222, %v223
      %v225 = vrot.slane %v204, 7
      %v226 = vrot.slane %v205, 7
      %v227 = vsel %vm218, %v225, %v226
      %v234 = vsub.f32 %v200, %v219
      %v235 = vsub.f32 %v201, %v221
      %v236 = vsub.f32 %v202, %v222
      %v237 = vsub.f32 %v203, %v224
      %v238 = vsub.f32 %v204, %v225
      %v239 = vsub.f32 %v205, %v227
      %v240 = vadd.f32 %v234, 1e-06
      %v241 = vadd.f32 %v235, 1e-06
      %v242 = vadd.f32 %v236, 1e-06
      %v243 = vadd.f32 %v237, 1e-06
      %v244 = vadd.f32 %v238, 1e-06
      %v245 = vadd.f32 %v239, 1e-06
      %246 = vrot.lane.b32.xlu0 %v200, 1
      %v247 = vpop.permute.xlu0 %246
      %248 = vrot.lane.b32.xlu0 %v201, 1
      %v249 = vpop.permute.xlu0 %248
      %250 = vrot.lane.b32.xlu0 %v202, 1
      %v251 = vpop.permute.xlu0 %250
      %252 = vrot.lane.b32.xlu0 %v203, 1
      %v253 = vpop.permute.xlu0 %252
      %254 = vrot.lane.b32.xlu0 %v204, 1
      %v255 = vpop.permute.xlu0 %254
      %256 = vrot.lane.b32.xlu0 %v205, 1
      %v257 = vpop.permute.xlu0 %256
      %v264 = vsub.f32 %v200, %v247
      %v265 = vsub.f32 %v201, %v249
      %v266 = vsub.f32 %v202, %v251
      %v267 = vsub.f32 %v203, %v253
      %v268 = vsub.f32 %v204, %v255
      %v269 = vsub.f32 %v205, %v257
      %v270 = vadd.f32 %v264, 1e-06
      %v271 = vadd.f32 %v265, 1e-06
      %v272 = vadd.f32 %v266, 1e-06
      %v273 = vadd.f32 %v267, 1e-06
      %v274 = vadd.f32 %v268, 1e-06
      %v275 = vadd.f32 %v269, 1e-06
      %v282 = vrot.slane %v206, 7
      %v283 = vrot.slane %v207, 7
      %v284 = vsel %vm218, %v282, %v283
      %v285 = vrot.slane %v208, 7
      %v286 = vrot.slane %v209, 7
      %v287 = vsel %vm218, %v285, %v286
      %v288 = vrot.slane %v210, 7
      %v289 = vrot.slane %v211, 7
      %v290 = vsel %vm218, %v288, %v289
      %v297 = vsub.f32 %v206, %v282
      %v298 = vsub.f32 %v207, %v284
      %v299 = vsub.f32 %v208, %v285
      %v300 = vsub.f32 %v209, %v287
      %v301 = vsub.f32 %v210, %v288
      %v302 = vsub.f32 %v211, %v290
      %v303 = vadd.f32 %v297, 1e-06
      %v304 = vadd.f32 %v298, 1e-06
      %v305 = vadd.f32 %v299, 1e-06
      %v306 = vadd.f32 %v300, 1e-06
      %v307 = vadd.f32 %v301, 1e-06
      %v308 = vadd.f32 %v302, 1e-06
      %309 = vrot.lane.b32.xlu0 %v206, 1
      %v310 = vpop.permute.xlu0 %309
      %311 = vrot.lane.b32.xlu0 %v207, 1
      %v312 = vpop.permute.xlu0 %311
      %313 = vrot.lane.b32.xlu0 %v208, 1
      %v314 = vpop.permute.xlu0 %313
      %315 = vrot.lane.b32.xlu0 %v209, 1
      %v316 = vpop.permute.xlu0 %315
      %317 = vrot.lane.b32.xlu0 %v210, 1
      %v318 = vpop.permute.xlu0 %317
      %319 = vrot.lane.b32.xlu0 %v211, 1
      %v320 = vpop.permute.xlu0 %319
      %v327 = vsub.f32 %v206, %v310
      %v328 = vsub.f32 %v207, %v312
      %v329 = vsub.f32 %v208, %v314
      %v330 = vsub.f32 %v209, %v316
      %v331 = vsub.f32 %v210, %v318
      %v332 = vsub.f32 %v211, %v320
      %v333 = vadd.f32 %v327, 1e-06
      %v334 = vadd.f32 %v328, 1e-06
      %v335 = vadd.f32 %v329, 1e-06
      %v336 = vadd.f32 %v330, 1e-06
      %v337 = vadd.f32 %v331, 1e-06
      %v338 = vadd.f32 %v332, 1e-06
      %v339 = vmul.f32 %v240, 0.5
      %v340 = vmul.f32 %v241, 0.5
      %v341 = vmul.f32 %v242, 0.5
      %v342 = vmul.f32 %v243, 0.5
      %v343 = vmul.f32 %v244, 0.5
      %v344 = vmul.f32 %v245, 0.5
      %v345 = vtanh.pop %v339
      %v346 = vtanh.pop %v340
      %v347 = vtanh.pop %v341
      %v348 = vtanh.pop %v342
      %v349 = vtanh.pop %v343
      %v350 = vtanh.pop %v344
      %v351 = vmul.f32 %v345, %v345
      %v352 = vmul.f32 %v346, %v346
      %v353 = vmul.f32 %v347, %v347
      %v354 = vmul.f32 %v348, %v348
      %v355 = vmul.f32 %v349, %v349
      %v356 = vmul.f32 %v350, %v350
      %v357 = vmul.f32 %v303, 0.5
      %v358 = vmul.f32 %v304, 0.5
      %v359 = vmul.f32 %v305, 0.5
      %v360 = vmul.f32 %v306, 0.5
      %v361 = vmul.f32 %v307, 0.5
      %v362 = vmul.f32 %v308, 0.5
      %v363 = vtanh.pop %v357
      %v364 = vtanh.pop %v358
      %v365 = vtanh.pop %v359
      %v366 = vtanh.pop %v360
      %v367 = vtanh.pop %v361
      %v368 = vtanh.pop %v362
      %v369 = vmul.f32 %v363, %v363
      %v370 = vmul.f32 %v364, %v364
      %v371 = vmul.f32 %v365, %v365
      %v372 = vmul.f32 %v366, %v366
      %v373 = vmul.f32 %v367, %v367
      %v374 = vmul.f32 %v368, %v368
      %v375 = vmul.f32 %v270, 0.5
      %v376 = vmul.f32 %v271, 0.5
      %v377 = vmul.f32 %v272, 0.5
      %v378 = vmul.f32 %v273, 0.5
      %v379 = vmul.f32 %v274, 0.5
      %v380 = vmul.f32 %v275, 0.5
      %v381 = vtanh.pop %v375
      %v382 = vtanh.pop %v376
      %v383 = vtanh.pop %v377
      %v384 = vtanh.pop %v378
      %v385 = vtanh.pop %v379
      %v386 = vtanh.pop %v380
      %v387 = vmul.f32 %v381, %v381
      %v388 = vmul.f32 %v382, %v382
      %v389 = vmul.f32 %v383, %v383
      %v390 = vmul.f32 %v384, %v384
      %v391 = vmul.f32 %v385, %v385
      %v392 = vmul.f32 %v386, %v386
      %v393 = vmul.f32 %v333, 0.5
      %v394 = vmul.f32 %v334, 0.5
      %v395 = vmul.f32 %v335, 0.5
      %v396 = vmul.f32 %v336, 0.5
      %v397 = vmul.f32 %v337, 0.5
      %v398 = vmul.f32 %v338, 0.5
      %v399 = vtanh.pop %v393
      %v400 = vtanh.pop %v394
      %v401 = vtanh.pop %v395
      %v402 = vtanh.pop %v396
      %v403 = vtanh.pop %v397
      %v404 = vtanh.pop %v398
      %v405 = vmul.f32 %v399, %v399
      %v406 = vmul.f32 %v400, %v400
      %v407 = vmul.f32 %v401, %v401
      %v408 = vmul.f32 %v402, %v402
      %v409 = vmul.f32 %v403, %v403
      %v410 = vmul.f32 %v404, %v404
      %v411 = vmul.f32 %v351, %v369
      %v412 = vmul.f32 %v352, %v370
      %v413 = vmul.f32 %v351, %v371
      %v414 = vmul.f32 %v352, %v372
      %v415 = vmul.f32 %v351, %v373
      %v416 = vmul.f32 %v352, %v374
      %v417 = vmul.f32 %v353, %v369
      %v418 = vmul.f32 %v354, %v370
      %v419 = vmul.f32 %v353, %v371
      %v420 = vmul.f32 %v354, %v372
      %v421 = vmul.f32 %v353, %v373
      %v422 = vmul.f32 %v354, %v374
      %v423 = vmul.f32 %v355, %v369
      %v424 = vmul.f32 %v356, %v370
      %v425 = vmul.f32 %v355, %v371
      %v426 = vmul.f32 %v356, %v372
      %v427 = vmul.f32 %v355, %v373
      %v428 = vmul.f32 %v356, %v374
      %vm429 = vcmask 130049
      %v430 = vsel %vm429, %v411, 0.0
      %431 = vadd.xlane.f32.xlu0 %v430
      %v432 = vpop.xlane.xlu0 %431
      %vm433 = vcmask 130048
      %v434 = vsel %vm433, %v412, 0.0
      %435 = vadd.xlane.f32.xlu0 %v434
      %v436 = vpop.xlane.xlu0 %435
      %v437 = vsel %vm429, %v413, 0.0
      %438 = vadd.xlane.f32.xlu0 %v437
      %v439 = vpop.xlane.xlu0 %438
      %v440 = vsel %vm433, %v414, 0.0
      %441 = vadd.xlane.f32.xlu0 %v440
      %v442 = vpop.xlane.xlu0 %441
      %v443 = vsel %vm429, %v415, 0.0
      %444 = vadd.xlane.f32.xlu0 %v443
      %v445 = vpop.xlane.xlu0 %444
      %v446 = vsel %vm433, %v416, 0.0
      %447 = vadd.xlane.f32.xlu0 %v446
      %v448 = vpop.xlane.xlu0 %447
      %v449 = vsel %vm429, %v417, 0.0
      %450 = vadd.xlane.f32.xlu0 %v449
      %v451 = vpop.xlane.xlu0 %450
      %v452 = vsel %vm433, %v418, 0.0
      %453 = vadd.xlane.f32.xlu0 %v452
      %v454 = vpop.xlane.xlu0 %453
      %v455 = vsel %vm429, %v419, 0.0
      %456 = vadd.xlane.f32.xlu0 %v455
      %v457 = vpop.xlane.xlu0 %456
      %v458 = vsel %vm433, %v420, 0.0
      %459 = vadd.xlane.f32.xlu0 %v458
      %v460 = vpop.xlane.xlu0 %459
      %v461 = vsel %vm429, %v421, 0.0
      %462 = vadd.xlane.f32.xlu0 %v461
      %v463 = vpop.xlane.xlu0 %462
      %v464 = vsel %vm433, %v422, 0.0
      %465 = vadd.xlane.f32.xlu0 %v464
      %v466 = vpop.xlane.xlu0 %465
      %v467 = vsel %vm429, %v423, 0.0
      %468 = vadd.xlane.f32.xlu0 %v467
      %v469 = vpop.xlane.xlu0 %468
      %v470 = vsel %vm433, %v424, 0.0
      %471 = vadd.xlane.f32.xlu0 %v470
      %v472 = vpop.xlane.xlu0 %471
      %v473 = vsel %vm429, %v425, 0.0
      %474 = vadd.xlane.f32.xlu0 %v473
      %v475 = vpop.xlane.xlu0 %474
      %v476 = vsel %vm433, %v426, 0.0
      %477 = vadd.xlane.f32.xlu0 %v476
      %v478 = vpop.xlane.xlu0 %477
      %v479 = vsel %vm429, %v427, 0.0
      %480 = vadd.xlane.f32.xlu0 %v479
      %v481 = vpop.xlane.xlu0 %480
      %v482 = vsel %vm433, %v428, 0.0
      %483 = vadd.xlane.f32.xlu0 %v482
      %v484 = vpop.xlane.xlu0 %483
      %v503 = vlaneseq
      %v504 = vand.u32 %v503, 127
      %v505 = vadd.s32 %v504, 1
      %v506 = vlaneseq
      %v507 = vshrl.u32 %v506, 7
      %v508 = vsub.s32 %v505, %v507
      %v509 = vrot.slane %v432, %v508
      %v510 = vadd.s32 %v504, 4294967289
      %v511 = vlaneseq
      %v512 = vshrl.u32 %v511, 7
      %v513 = vsub.s32 %v510, %v512
      %v514 = vrot.slane %v436, %v513
      %vm515 = vcmask 121912
      %v516 = vsel %vm515, %v514, %v509
      %v517 = vlaneseq
      %v518 = vshrl.u32 %v517, 7
      %v519 = vsub.s32 %v505, %v518
      %v520 = vrot.slane %v439, %v519
      %v521 = vlaneseq
      %v522 = vshrl.u32 %v521, 7
      %v523 = vsub.s32 %v510, %v522
      %v524 = vrot.slane %v442, %v523
      %v525 = vsel %vm515, %v524, %v520
      %v526 = vlaneseq
      %v527 = vshrl.u32 %v526, 7
      %v528 = vsub.s32 %v505, %v527
      %v529 = vrot.slane %v445, %v528
      %v530 = vlaneseq
      %v531 = vshrl.u32 %v530, 7
      %v532 = vsub.s32 %v510, %v531
      %v533 = vrot.slane %v448, %v532
      %v534 = vsel %vm515, %v533, %v529
      %v535 = vlaneseq
      %v536 = vshrl.u32 %v535, 7
      %v537 = vsub.s32 %v505, %v536
      %v538 = vrot.slane %v451, %v537
      %v539 = vlaneseq
      %v540 = vshrl.u32 %v539, 7
      %v541 = vsub.s32 %v510, %v540
      %v542 = vrot.slane %v454, %v541
      %v543 = vsel %vm515, %v542, %v538
      %v544 = vlaneseq
      %v545 = vshrl.u32 %v544, 7
      %v546 = vsub.s32 %v505, %v545
      %v547 = vrot.slane %v457, %v546
      %v548 = vlaneseq
      %v549 = vshrl.u32 %v548, 7
      %v550 = vsub.s32 %v510, %v549
      %v551 = vrot.slane %v460, %v550
      %v552 = vsel %vm515, %v551, %v547
      %v553 = vlaneseq
      %v554 = vshrl.u32 %v553, 7
      %v555 = vsub.s32 %v505, %v554
      %v556 = vrot.slane %v463, %v555
      %v557 = vlaneseq
      %v558 = vshrl.u32 %v557, 7
      %v559 = vsub.s32 %v510, %v558
      %v560 = vrot.slane %v466, %v559
      %v561 = vsel %vm515, %v560, %v556
      %v562 = vlaneseq
      %v563 = vshrl.u32 %v562, 7
      %v564 = vsub.s32 %v505, %v563
      %v565 = vrot.slane %v469, %v564
      %v566 = vlaneseq
      %v567 = vshrl.u32 %v566, 7
      %v568 = vsub.s32 %v510, %v567
      %v569 = vrot.slane %v472, %v568
      %v570 = vsel %vm515, %v569, %v565
      %v571 = vlaneseq
      %v572 = vshrl.u32 %v571, 7
      %v573 = vsub.s32 %v505, %v572
      %v574 = vrot.slane %v475, %v573
      %v575 = vlaneseq
      %v576 = vshrl.u32 %v575, 7
      %v577 = vsub.s32 %v510, %v576
      %v578 = vrot.slane %v478, %v577
      %v579 = vsel %vm515, %v578, %v574
      %v580 = vlaneseq
      %v581 = vshrl.u32 %v580, 7
      %v582 = vsub.s32 %v505, %v581
      %v583 = vrot.slane %v481, %v582
      %v584 = vlaneseq
      %v585 = vshrl.u32 %v584, 7
      %v586 = vsub.s32 %v510, %v585
      %v587 = vrot.slane %v484, %v586
      %v588 = vsel %vm515, %v587, %v583
      %vm589 = vcmask 1041409
      %v590 = vsel %vm589, %v525, %v516
      %vm591 = vcmask 1042434
      %v592 = vsel %vm591, %v534, %v590
      %v593 = vsel %vm589, %v552, %v543
      %v594 = vsel %vm591, %v561, %v593
      %v595 = vsel %vm589, %v579, %v570
      %v596 = vsel %vm591, %v588, %v595
      %vm600 = vcmask 116736
      %v601 = vsel %vm600, %v592, 0.0
      %602 = vadd.xlane.f32.xlu0 %v601
      %v603 = vpop.xlane.xlu0 %602
      %v604 = vsel %vm600, %v594, 0.0
      %605 = vadd.xlane.f32.xlu0 %v604
      %v606 = vpop.xlane.xlu0 %605
      %v607 = vsel %vm600, %v596, 0.0
      %608 = vadd.xlane.f32.xlu0 %v607
      %v609 = vpop.xlane.xlu0 %608
      %v613 = vlaneseq
      %v614 = vshrl.u32 %v613, 7
      %v615 = vsub.s32 %v504, %v614
      %v616 = vrot.slane %v603, %v615
      %v617 = vlaneseq
      %v618 = vshrl.u32 %v617, 7
      %v619 = vsub.s32 %v504, %v618
      %v620 = vrot.slane %v606, %v619
      %v621 = vlaneseq
      %v622 = vshrl.u32 %v621, 7
      %v623 = vsub.s32 %v504, %v622
      %v624 = vrot.slane %v609, %v623
      %v625 = vsel %vm589, %v620, %v616
      %v626 = vsel %vm591, %v624, %v625
      %vm628 = vcmask 18432
      %629 = vst.msk [vmem:[%s195] sm:$0x7] %vm628, %v626
      %v630 = vmul.f32 %v387, %v405
      %v631 = vmul.f32 %v388, %v406
      %v632 = vmul.f32 %v387, %v407
      %v633 = vmul.f32 %v388, %v408
      %v634 = vmul.f32 %v387, %v409
      %v635 = vmul.f32 %v388, %v410
      %v636 = vmul.f32 %v389, %v405
      %v637 = vmul.f32 %v390, %v406
      %v638 = vmul.f32 %v389, %v407
      %v639 = vmul.f32 %v390, %v408
      %v640 = vmul.f32 %v389, %v409
      %v641 = vmul.f32 %v390, %v410
      %v642 = vmul.f32 %v391, %v405
      %v643 = vmul.f32 %v392, %v406
      %v644 = vmul.f32 %v391, %v407
      %v645 = vmul.f32 %v392, %v408
      %v646 = vmul.f32 %v391, %v409
      %v647 = vmul.f32 %v392, %v410
      %666 = vrot.lane.b32.xlu0 %v630, 127
      %v667 = vpop.permute.xlu0 %666
      %668 = vrot.lane.b32.xlu0 %v631, 127
      %v669 = vpop.permute.xlu0 %668
      %670 = vrot.lane.b32.xlu0 %v632, 127
      %v671 = vpop.permute.xlu0 %670
      %672 = vrot.lane.b32.xlu0 %v633, 127
      %v673 = vpop.permute.xlu0 %672
      %674 = vrot.lane.b32.xlu0 %v634, 127
      %v675 = vpop.permute.xlu0 %674
      %676 = vrot.lane.b32.xlu0 %v635, 127
      %v677 = vpop.permute.xlu0 %676
      %678 = vrot.lane.b32.xlu0 %v636, 127
      %v679 = vpop.permute.xlu0 %678
      %680 = vrot.lane.b32.xlu0 %v637, 127
      %v681 = vpop.permute.xlu0 %680
      %682 = vrot.lane.b32.xlu0 %v638, 127
      %v683 = vpop.permute.xlu0 %682
      %684 = vrot.lane.b32.xlu0 %v639, 127
      %v685 = vpop.permute.xlu0 %684
      %686 = vrot.lane.b32.xlu0 %v640, 127
      %v687 = vpop.permute.xlu0 %686
      %688 = vrot.lane.b32.xlu0 %v641, 127
      %v689 = vpop.permute.xlu0 %688
      %690 = vrot.lane.b32.xlu0 %v642, 127
      %v691 = vpop.permute.xlu0 %690
      %692 = vrot.lane.b32.xlu0 %v643, 127
      %v693 = vpop.permute.xlu0 %692
      %694 = vrot.lane.b32.xlu0 %v644, 127
      %v695 = vpop.permute.xlu0 %694
      %696 = vrot.lane.b32.xlu0 %v645, 127
      %v697 = vpop.permute.xlu0 %696
      %698 = vrot.lane.b32.xlu0 %v646, 127
      %v699 = vpop.permute.xlu0 %698
      %700 = vrot.lane.b32.xlu0 %v647, 127
      %v701 = vpop.permute.xlu0 %700
      %vm720 = vcmask 121856
      %v721 = vsel %vm720, %v667, 0.0
      %722 = vadd.xlane.f32.xlu0 %v721
      %v723 = vpop.xlane.xlu0 %722
      %v724 = vsel %vm720, %v669, 0.0
      %725 = vadd.xlane.f32.xlu0 %v724
      %v726 = vpop.xlane.xlu0 %725
      %v727 = vsel %vm720, %v671, 0.0
      %728 = vadd.xlane.f32.xlu0 %v727
      %v729 = vpop.xlane.xlu0 %728
      %v730 = vsel %vm720, %v673, 0.0
      %731 = vadd.xlane.f32.xlu0 %v730
      %v732 = vpop.xlane.xlu0 %731
      %v733 = vsel %vm720, %v675, 0.0
      %734 = vadd.xlane.f32.xlu0 %v733
      %v735 = vpop.xlane.xlu0 %734
      %v736 = vsel %vm720, %v677, 0.0
      %737 = vadd.xlane.f32.xlu0 %v736
      %v738 = vpop.xlane.xlu0 %737
      %v739 = vsel %vm720, %v679, 0.0
      %740 = vadd.xlane.f32.xlu0 %v739
      %v741 = vpop.xlane.xlu0 %740
      %v742 = vsel %vm720, %v681, 0.0
      %743 = vadd.xlane.f32.xlu0 %v742
      %v744 = vpop.xlane.xlu0 %743
      %v745 = vsel %vm720, %v683, 0.0
      %746 = vadd.xlane.f32.xlu0 %v745
      %v747 = vpop.xlane.xlu0 %746
      %v748 = vsel %vm720, %v685, 0.0
      %749 = vadd.xlane.f32.xlu0 %v748
      %v750 = vpop.xlane.xlu0 %749
      %v751 = vsel %vm720, %v687, 0.0
      %752 = vadd.xlane.f32.xlu0 %v751
      %v753 = vpop.xlane.xlu0 %752
      %v754 = vsel %vm720, %v689, 0.0
      %755 = vadd.xlane.f32.xlu0 %v754
      %v756 = vpop.xlane.xlu0 %755
      %v757 = vsel %vm720, %v691, 0.0
      %758 = vadd.xlane.f32.xlu0 %v757
      %v759 = vpop.xlane.xlu0 %758
      %v760 = vsel %vm720, %v693, 0.0
      %761 = vadd.xlane.f32.xlu0 %v760
      %v762 = vpop.xlane.xlu0 %761
      %v763 = vsel %vm720, %v695, 0.0
      %764 = vadd.xlane.f32.xlu0 %v763
      %v765 = vpop.xlane.xlu0 %764
      %v766 = vsel %vm720, %v697, 0.0
      %767 = vadd.xlane.f32.xlu0 %v766
      %v768 = vpop.xlane.xlu0 %767
      %v769 = vsel %vm720, %v699, 0.0
      %770 = vadd.xlane.f32.xlu0 %v769
      %v771 = vpop.xlane.xlu0 %770
      %v772 = vsel %vm720, %v701, 0.0
      %773 = vadd.xlane.f32.xlu0 %v772
      %v774 = vpop.xlane.xlu0 %773
      %v793 = vlaneseq
      %v794 = vshrl.u32 %v793, 7
      %v795 = vsub.s32 %v504, %v794
      %v796 = vrot.slane %v723, %v795
      %v797 = vadd.s32 %v504, 4294967288
      %v798 = vlaneseq
      %v799 = vshrl.u32 %v798, 7
      %v800 = vsub.s32 %v797, %v799
      %v801 = vrot.slane %v726, %v800
      %vm802 = vcmask 130112
      %v803 = vsel %vm802, %v801, %v796
      %v804 = vlaneseq
      %v805 = vshrl.u32 %v804, 7
      %v806 = vsub.s32 %v504, %v805
      %v807 = vrot.slane %v729, %v806
      %v808 = vlaneseq
      %v809 = vshrl.u32 %v808, 7
      %v810 = vsub.s32 %v797, %v809
      %v811 = vrot.slane %v732, %v810
      %v812 = vsel %vm802, %v811, %v807
      %v813 = vlaneseq
      %v814 = vshrl.u32 %v813, 7
      %v815 = vsub.s32 %v504, %v814
      %v816 = vrot.slane %v735, %v815
      %v817 = vlaneseq
      %v818 = vshrl.u32 %v817, 7
      %v819 = vsub.s32 %v797, %v818
      %v820 = vrot.slane %v738, %v819
      %v821 = vsel %vm802, %v820, %v816
      %v822 = vlaneseq
      %v823 = vshrl.u32 %v822, 7
      %v824 = vsub.s32 %v504, %v823
      %v825 = vrot.slane %v741, %v824
      %v826 = vlaneseq
      %v827 = vshrl.u32 %v826, 7
      %v828 = vsub.s32 %v797, %v827
      %v829 = vrot.slane %v744, %v828
      %v830 = vsel %vm802, %v829, %v825
      %v831 = vlaneseq
      %v832 = vshrl.u32 %v831, 7
      %v833 = vsub.s32 %v504, %v832
      %v834 = vrot.slane %v747, %v833
      %v835 = vlaneseq
      %v836 = vshrl.u32 %v835, 7
      %v837 = vsub.s32 %v797, %v836
      %v838 = vrot.slane %v750, %v837
      %v839 = vsel %vm802, %v838, %v834
      %v840 = vlaneseq
      %v841 = vshrl.u32 %v840, 7
      %v842 = vsub.s32 %v504, %v841
      %v843 = vrot.slane %v753, %v842
      %v844 = vlaneseq
      %v845 = vshrl.u32 %v844, 7
      %v846 = vsub.s32 %v797, %v845
      %v847 = vrot.slane %v756, %v846
      %v848 = vsel %vm802, %v847, %v843
      %v849 = vlaneseq
      %v850 = vshrl.u32 %v849, 7
      %v851 = vsub.s32 %v504, %v850
      %v852 = vrot.slane %v759, %v851
      %v853 = vlaneseq
      %v854 = vshrl.u32 %v853, 7
      %v855 = vsub.s32 %v797, %v854
      %v856 = vrot.slane %v762, %v855
      %v857 = vsel %vm802, %v856, %v852
      %v858 = vlaneseq
      %v859 = vshrl.u32 %v858, 7
      %v860 = vsub.s32 %v504, %v859
      %v861 = vrot.slane %v765, %v860
      %v862 = vlaneseq
      %v863 = vshrl.u32 %v862, 7
      %v864 = vsub.s32 %v797, %v863
      %v865 = vrot.slane %v768, %v864
      %v866 = vsel %vm802, %v865, %v861
      %v867 = vlaneseq
      %v868 = vshrl.u32 %v867, 7
      %v869 = vsub.s32 %v504, %v868
      %v870 = vrot.slane %v771, %v869
      %v871 = vlaneseq
      %v872 = vshrl.u32 %v871, 7
      %v873 = vsub.s32 %v797, %v872
      %v874 = vrot.slane %v774, %v873
      %v875 = vsel %vm802, %v874, %v870
      %v876 = vsel %vm589, %v812, %v803
      %v877 = vsel %vm591, %v821, %v876
      %v878 = vsel %vm589, %v839, %v830
      %v879 = vsel %vm591, %v848, %v878
      %v880 = vsel %vm589, %v866, %v857
      %v881 = vsel %vm591, %v875, %v880
      %vm885 = vcmask 124928
      %v886 = vsel %vm885, %v877, 0.0
      %887 = vadd.xlane.f32.xlu0 %v886
      %v888 = vpop.xlane.xlu0 %887
      %v889 = vsel %vm885, %v879, 0.0
      %890 = vadd.xlane.f32.xlu0 %v889
      %v891 = vpop.xlane.xlu0 %890
      %v892 = vsel %vm885, %v881, 0.0
      %893 = vadd.xlane.f32.xlu0 %v892
      %v894 = vpop.xlane.xlu0 %893
      %v898 = vlaneseq
      %v899 = vshrl.u32 %v898, 7
      %v900 = vsub.s32 %v504, %v899
      %v901 = vrot.slane %v888, %v900
      %v902 = vlaneseq
      %v903 = vshrl.u32 %v902, 7
      %v904 = vsub.s32 %v504, %v903
      %v905 = vrot.slane %v891, %v904
      %v906 = vlaneseq
      %v907 = vshrl.u32 %v906, 7
      %v908 = vsub.s32 %v504, %v907
      %v909 = vrot.slane %v894, %v908
      %v910 = vsel %vm589, %v905, %v901
      %v911 = vsel %vm591, %v909, %v910
      %913 = vst.msk [vmem:[%s199] sm:$0x7] %vm628, %v911
      %p914 = scmp.lt.s32.totalorder %s15, 1
      %s915 = scalar_select %p914, %s15, 1
      %s916 = smul.addr %s915, 4
      %s917 = scalar_lea.vmem %s2, %s916
      %p918 = scmp.lt.s32.totalorder %s15, 1
      %s919 = scalar_select %p918, %s15, 1
      %s920 = smul.addr %s919, 4
      %s921 = scalar_lea.vmem %s3, %s920
      // Predicated region
      $region29: #{exclusion_loss.3} parent=27 // pred_check
        %p922 = pneg %p85
      $region30: #{exclusion_loss.3} parent=27 // pred_check_branch
        %924 = sbr.rel (%p922) target = $region32
      $region31: #{exclusion_loss.3} parent=27 // pred_region
        _
      $region32: #{exclusion_loss.3} parent=27 // pred_fallthru
        _
      // Predicated region
      $region33: #{exclusion_loss.3} parent=27 // pred_check
        %p925 = pneg %p111
      $region34: #{exclusion_loss.3} parent=27 // pred_check_branch
        %927 = sbr.rel (%p925) target = $region36
      $region35: #{exclusion_loss.3} parent=27 // pred_region
        _
      $region36: #{exclusion_loss.3} parent=27 // pred_fallthru
        _
    $region28: #{exclusion_loss.3} parent=5 // pred_fallthru
      _
    %p928 = scmp.le.s32.totalorder 2, %s10
    // Predicated region
    $region37: #{exclusion_loss.3} parent=5 // pred_check
      %p929 = pneg %p928
    $region38: #{exclusion_loss.3} parent=5 // pred_check_branch
      %931 = sbr.rel (%p929) target = $region40
    $region39: #{exclusion_loss.3} parent=5 // pred_region
      %s932 = ssub.s32 %s10, 2
      // Predicated region
      $region41: #{exclusion_loss.3} parent=39 // pred_check
        %p933 = pneg %p91
      $region42: #{exclusion_loss.3} parent=39 // pred_check_branch
        %935 = sbr.rel (%p933) target = $region44
      $region43: #{exclusion_loss.3} parent=39 // pred_region
        %p936 = scmp.lt.s32.totalorder %s16, 1
        %s937 = scalar_select %p936, %s16, 1
        %s938 = smul.addr %s937, 4
        %s939 = scalar_lea.vmem %s2, %s938
      $region44: #{exclusion_loss.3} parent=39 // pred_fallthru
        _
      // Predicated region
      $region45: #{exclusion_loss.3} parent=39 // pred_check
        %p940 = pneg %p117
      $region46: #{exclusion_loss.3} parent=39 // pred_check_branch
        %942 = sbr.rel (%p940) target = $region48
      $region47: #{exclusion_loss.3} parent=39 // pred_region
        %p943 = scmp.lt.s32.totalorder %s16, 1
        %s944 = scalar_select %p943, %s16, 1
        %s945 = smul.addr %s944, 4
        %s946 = scalar_lea.vmem %s3, %s945
      $region48: #{exclusion_loss.3} parent=39 // pred_fallthru
        _
    $region40: #{exclusion_loss.3} parent=5 // pred_fallthru
      _
  $region6: #{exclusion_loss.3} parent=0 // loop_footer
    %s14 = sadd.s32 1, %s10
  $region7: #{exclusion_loss.3} parent=0 // loop_footer_branch
    %9 = sbr.rel target = $region3
  $region8: #{exclusion_loss.3} parent=0 // loop_exit
    _

</llo_original>
